<compile_context>
chip_gen: v6e
topology: v6e:2x2x1
jax: 0.10.0
libtpu: 0.0.40
codegen_flags: <defaults>
</compile_context>

<pallas_src>
import jax
import jax.numpy as jnp
from jax.experimental import pallas as pl
from jax.experimental.pallas import tpu as pltpu

# ---------------- problem sizes (small, consistent with the module) ----------------
VOCAB = 50            # vocab_size
VOCABP = 64           # lane-padded vocab for the one-hot matmul
B = 2                 # batch
S = 8                 # sequence length
E = 32                # embedding_dim
H = 32                # hidden_dim (per LSTM direction)
CIN = E + 2 * H       # conv input channels = 96
CINP = 128            # lane-padded conv input channels
COUT = 100            # conv output channels
COUTP = 128           # lane-padded conv output channels
K = 3                 # conv kernel size
L = S - K + 1         # conv output length (no padding) = 6
P = (L - 3) // 2 + 1  # MaxPool1d(3,2) output length = 2
C = 10                # num_classes


def rcnn_kernel(ids_ref,                       # VMEM [S*B, 2] int32: (fwd id, rev id + VOCABP)
                emb_ref,                       # [2*VOCABP, 2E]  blockdiag(emb_pad, emb_pad)
                wih_ref, b_ref,                # [2E, 8H], [1, 8H]   interleaved-gate layout
                whh_ref,                       # [2H, 8H]            block-diag, interleaved gates
                wck_ref, bc_ref,               # [K*CINP, COUTP], [1, COUTP]
                wfc_ref, bfc_ref,              # [COUTP, C], [1, C]
                out_ref,                       # [B, C]
                cat_s):                        # scratch [S*B, CINP]  (time-major rows t*B+b)
    f32 = jnp.float32

    # ---- (1) embedding gather for fwd AND time-reversed ids as ONE one-hot matmul ----
    ids = ids_ref[...]                                                        # [S*B, 2]
    lane = jax.lax.broadcasted_iota(jnp.int32, (S * B, 2 * VOCABP), 1)        # [16, 128]
    onehot = ((lane == ids[:, 0:1]) | (lane == ids[:, 1:2])).astype(f32)
    # x_pair[:, 0:E] = x(t), x_pair[:, E:2E] = x(S-1-t)
    x_pair = jnp.dot(onehot, emb_ref[...], preferred_element_type=f32)        # [S*B, 2E]

    # ---- (2) hoisted input projection for BOTH directions, interleaved-gate layout ----
    gx = jnp.dot(x_pair, wih_ref[...], preferred_element_type=f32) + b_ref[...]   # [S*B, 8H]
    gx_steps = [gx[t * B:(t + 1) * B, :] for t in range(S)]   # pre-sliced, off the serial chain

    # ---- (3) fused bidirectional recurrence: ONE matmul + ONE cell per step ----
    # gate columns: [i_f|i_b | f_f|f_b | g_f|g_b | o_f|o_b], h/c layout: [fwd | bwd]
    whh = whh_ref[...]                                                        # [2H, 8H]
    h_cat = jnp.zeros((B, 2 * H), f32)
    c_cat = jnp.zeros((B, 2 * H), f32)
    hs = []
    for t in range(S):
        gates = gx_steps[t] + jnp.dot(h_cat, whh, preferred_element_type=f32)  # [B, 8H]
        sg = jax.nn.sigmoid(gates)                    # one EUP pass over all 8 gates
        i_g = sg[:, 0:2 * H]
        f_g = sg[:, 2 * H:4 * H]
        o_g = sg[:, 6 * H:8 * H]
        g_g = jnp.tanh(gates[:, 4 * H:6 * H])         # tanh only on the g gates
        c_cat = f_g * c_cat + i_g * g_g
        h_cat = o_g * jnp.tanh(c_cat)
        hs.append(h_cat)                              # stays in vregs; no in-loop stores

    # ---- (4) assemble [x | h_fwd | h_bwd | 0pad] and write cat buffer with ONE store ----
    h_fwd = jnp.concatenate([hs[t][:, 0:H] for t in range(S)], axis=0)              # time order
    h_bwd = jnp.concatenate([hs[S - 1 - t][:, H:2 * H] for t in range(S)], axis=0)  # time order
    pad = jnp.zeros((S * B, CINP - CIN), f32)
    cat_s[...] = jnp.concatenate([x_pair[:, 0:E], h_fwd, h_bwd, pad], axis=1)       # [16, 128]

    # ---- (5) Conv1d(k=3, no padding) as K accumulating matmuls (no im2col concat) ----
    conv = jnp.zeros((L * B, COUTP), f32)
    for k in range(K):
        conv = conv + jnp.dot(cat_s[k * B:(k + L) * B, :],
                              wck_ref[k * CINP:(k + 1) * CINP, :],
                              preferred_element_type=f32)
    conv = jnp.maximum(conv + bc_ref[...], 0.0)

    # ---- (6) MaxPool1d(kernel=3, stride=2) over time, then mean over pooled windows ----
    acc = jnp.zeros((B, COUTP), f32)
    for p_ in range(P):
        base = 2 * p_ * B
        w = jnp.maximum(jnp.maximum(conv[base:base + B], conv[base + B:base + 2 * B]),
                        conv[base + 2 * B:base + 3 * B])
        acc = acc + w
    feat = acc * (1.0 / P)                            # [B, COUTP]

    # ---- (7) Dropout(p=0.5) is identity at inference; final Linear ----
    out_ref[...] = (jnp.dot(feat, wfc_ref[...], preferred_element_type=f32)
                    + bfc_ref[...])


def _rcnn_forward_impl(input_ids, pk):
    # tiny index prep (fused into the same XLA program by jit): time-major fwd / reversed ids
    ids_tm = jnp.transpose(input_ids).astype(jnp.int32)          # [S, B]
    ids_f = ids_tm.reshape(S * B, 1)
    ids_b = ids_tm[::-1].reshape(S * B, 1) + VOCABP              # shifted into lanes [64,128)
    ids2 = jnp.concatenate([ids_f, ids_b], axis=1)               # [S*B, 2]

    vmem = pl.BlockSpec(memory_space=pltpu.MemorySpace.VMEM)
    args = (ids2, pk["emb_bd"], pk["wih_bd"], pk["b_bd"], pk["whh_bd"],
            pk["wck"], pk["bc"], pk["wfc"], pk["bfc"])
    return pl.pallas_call(
        rcnn_kernel,
        out_shape=jax.ShapeDtypeStruct((B, C), jnp.float32),
        in_specs=[vmem] * len(args),
        out_specs=vmem,
        scratch_shapes=[pltpu.VMEM((S * B, CINP), jnp.float32)],
    )(*args)


_rcnn_forward_jit = jax.jit(_rcnn_forward_impl)


def rcnn_forward(input_ids, pk, attention_mask=None):
    """input_ids: int32 [B, S]; pk: packed kernel params. Returns logits [B, C]."""
    del attention_mask  # unused by the original module as well
    return _rcnn_forward_jit(input_ids, pk)


# --------------------------- parameter packing for the kernel ---------------------------
def pack_params(p):
    f32 = jnp.float32
    # block-diagonal embedding for the paired one-hot matmul: [2*VOCABP, 2E]
    emb_pad = jnp.zeros((VOCABP, E), f32).at[:VOCAB, :].set(p["emb"])
    emb_bd = (jnp.zeros((2 * VOCABP, 2 * E), f32)
              .at[0:VOCABP, 0:E].set(emb_pad)
              .at[VOCABP:, E:].set(emb_pad))
    # interleaved-gate block-diagonal projections: columns [i_f|i_b|f_f|f_b|g_f|g_b|o_f|o_b]
    wih_bd = jnp.zeros((2 * E, 8 * H), f32)
    whh_bd = jnp.zeros((2 * H, 8 * H), f32)
    b_bd = jnp.zeros((1, 8 * H), f32)
    for g in range(4):
        cf = slice(2 * g * H, 2 * g * H + H)         # fwd cols of gate g
        cb = slice(2 * g * H + H, 2 * (g + 1) * H)   # bwd cols of gate g
        sg = slice(g * H, (g + 1) * H)
        wih_bd = (wih_bd.at[0:E, cf].set(p["wih_f"][:, sg])
                        .at[E:2 * E, cb].set(p["wih_b"][:, sg]))
        whh_bd = (whh_bd.at[0:H, cf].set(p["whh_f"][:, sg])
                        .at[H:2 * H, cb].set(p["whh_b"][:, sg]))
        b_bd = (b_bd.at[:, cf].set(p["b_f"][:, sg])
                     .at[:, cb].set(p["b_b"][:, sg]))
    # conv weight: pad CIN->128 and COUT->128 with zeros, flatten to im2col layout
    wc_pad = jnp.zeros((K, CINP, COUTP), f32).at[:, :CIN, :COUT].set(p["wc"])
    wck = wc_pad.reshape(K * CINP, COUTP)                              # [384, 128]
    bc = jnp.zeros((1, COUTP), f32).at[:, :COUT].set(p["bc"])
    wfc = jnp.zeros((COUTP, C), f32).at[:COUT, :].set(p["wfc"])
    return {"emb_bd": emb_bd, "wih_bd": wih_bd, "b_bd": b_bd, "whh_bd": whh_bd,
            "wck": wck, "bc": bc, "wfc": wfc, "bfc": p["bfc"]}


# ----------------------- pure-JAX reference (for validation) -----------------------
def rcnn_reference(input_ids, p):
    x = p["emb"][input_ids]                         # [B, S, E]
    xs = jnp.transpose(x, (1, 0, 2))                # [S, B, E]

    def run_dir(seq, wih, whh, b):
        def step(carry, x_t):
            h, c = carry
            g = x_t @ wih + h @ whh + b
            i = jax.nn.sigmoid(g[:, :H]); f = jax.nn.sigmoid(g[:, H:2 * H])
            gg = jnp.tanh(g[:, 2 * H:3 * H]); o = jax.nn.sigmoid(g[:, 3 * H:])
            c = f * c + i * gg
            h = o * jnp.tanh(c)
            return (h, c), h
        init = (jnp.zeros((B, H)), jnp.zeros((B, H)))
        _, hs = jax.lax.scan(step, init, seq)
        return hs                                   # [S, B, H]

    hf = run_dir(xs, p["wih_f"], p["whh_f"], p["b_f"])
    hb = run_dir(xs[::-1], p["wih_b"], p["whh_b"], p["b_b"])[::-1]
    cat = jnp.concatenate([xs, hf, hb], axis=-1)    # [S, B, CIN]

    conv = jnp.broadcast_to(p["bc"], (L, B, COUT))
    for k in range(K):
        conv = conv + jnp.einsum("sbc,co->sbo", cat[k:k + L], p["wc"][k])
    conv = jnp.maximum(conv, 0.0)

    pooled = jnp.stack([jnp.max(conv[2 * i:2 * i + 3], axis=0) for i in range(P)], axis=0)
    feat = jnp.mean(pooled, axis=0)                 # [B, COUT]
    return feat @ p["wfc"] + p["bfc"]


def make_params(key):
    ks = jax.random.split(key, 12)
    n = lambda k, shape: (0.1 * jax.random.normal(k, shape)).astype(jnp.float32)
    return {
        "emb":   n(ks[0], (VOCAB, E)),
        # LSTM weights pre-transposed for [rows, in] @ [in, 4H]; bias = b_ih + b_hh combined.
        "wih_f": n(ks[1], (E, 4 * H)), "whh_f": n(ks[2], (H, 4 * H)), "b_f": n(ks[3], (1, 4 * H)),
        "wih_b": n(ks[4], (E, 4 * H)), "whh_b": n(ks[5], (H, 4 * H)), "b_b": n(ks[6], (1, 4 * H)),
        # Conv1d weight stored as [K, CIN, COUT] (torch layout is [COUT, CIN, K]).
        "wc":    n(ks[7], (K, CIN, COUT)), "bc": n(ks[8], (1, COUT)),
        # Linear stored as [COUT, C] (torch layout is [C, COUT]).
        "wfc":   n(ks[9], (COUT, C)), "bfc": n(ks[10], (1, C)),
    }


if __name__ == "__main__":
    key = jax.random.PRNGKey(0)
    pkey, dkey = jax.random.split(key)
    params = make_params(pkey)
    packed = pack_params(params)
    input_ids = jax.random.randint(dkey, (B, S), 0, VOCAB, dtype=jnp.int32)

    logits = jax.block_until_ready(rcnn_forward(input_ids, packed))

    ref = rcnn_reference(input_ids, params)
    assert logits.shape == (B, C)
    assert jnp.allclose(logits, ref, rtol=1e-3, atol=1e-3), (logits, ref)

    print("KERNEL_OK")
</pallas_src>

<mosaic_0001>
module attributes {stable_mosaic.version = 11 : i64} {
  func.func @rcnn_kernel(%arg0: memref<16x2xi32, #tpu.memory_space<vmem>>, %arg1: memref<128x64xf32, #tpu.memory_space<vmem>>, %arg2: memref<64x256xf32, #tpu.memory_space<vmem>>, %arg3: memref<1x256xf32, #tpu.memory_space<vmem>>, %arg4: memref<64x256xf32, #tpu.memory_space<vmem>>, %arg5: memref<384x128xf32, #tpu.memory_space<vmem>>, %arg6: memref<1x128xf32, #tpu.memory_space<vmem>>, %arg7: memref<128x10xf32, #tpu.memory_space<vmem>>, %arg8: memref<1x10xf32, #tpu.memory_space<vmem>>, %arg9: memref<2x10xf32, #tpu.memory_space<vmem>>, %arg10: memref<16x128xf32, #tpu.memory_space<vmem>>) attributes {dimension_semantics = [], scalar_prefetch = 0 : i64, scratch_operands = 1 : i64, tpu.core_type = #tpu.core_type<tc>} {
    %c0 = arith.constant 0 : index
    %c0_0 = arith.constant 0 : index
    %0 = vector.load %arg0[%c0, %c0_0] : memref<16x2xi32, #tpu.memory_space<vmem>>, vector<16x2xi32>
    %1 = tpu.iota {dimensions = array<i32: 1>} : vector<16x128xi32>
    %2 = vector.extract_strided_slice %0 {offsets = [0, 0], sizes = [16, 1], strides = [1, 1]} : vector<16x2xi32> to vector<16x1xi32>
    %3 = vector.broadcast %2 : vector<16x1xi32> to vector<16x128xi32>
    %4 = arith.cmpi eq, %1, %3 : vector<16x128xi32>
    %5 = vector.extract_strided_slice %0 {offsets = [0, 1], sizes = [16, 1], strides = [1, 1]} : vector<16x2xi32> to vector<16x1xi32>
    %6 = vector.broadcast %5 : vector<16x1xi32> to vector<16x128xi32>
    %7 = arith.cmpi eq, %1, %6 : vector<16x128xi32>
    %8 = arith.ori %4, %7 : vector<16x128xi1>
    %9 = arith.extui %8 : vector<16x128xi1> to vector<16x128xi32>
    %10 = arith.sitofp %9 : vector<16x128xi32> to vector<16x128xf32>
    %c0_1 = arith.constant 0 : index
    %c0_2 = arith.constant 0 : index
    %11 = vector.load %arg1[%c0_1, %c0_2] : memref<128x64xf32, #tpu.memory_space<vmem>>, vector<128x64xf32>
    %cst = arith.constant dense<0.000000e+00> : vector<16x64xf32>
    %12 = tpu.matmul %10, %11, %cst {dimension_numbers = #tpu.dot_dimension_numbers<[1], [0], [0], [1], [0, 0, 1, 1], [], []>} : vector<16x128xf32>, vector<128x64xf32>, vector<16x64xf32> -> vector<16x64xf32>
    %c0_3 = arith.constant 0 : index
    %c0_4 = arith.constant 0 : index
    %13 = vector.load %arg2[%c0_3, %c0_4] : memref<64x256xf32, #tpu.memory_space<vmem>>, vector<64x256xf32>
    %cst_5 = arith.constant dense<0.000000e+00> : vector<16x256xf32>
    %14 = tpu.matmul %12, %13, %cst_5 {dimension_numbers = #tpu.dot_dimension_numbers<[1], [0], [0], [1], [0, 0, 1, 1], [], []>} : vector<16x64xf32>, vector<64x256xf32>, vector<16x256xf32> -> vector<16x256xf32>
    %c0_6 = arith.constant 0 : index
    %c0_7 = arith.constant 0 : index
    %15 = vector.load %arg3[%c0_6, %c0_7] : memref<1x256xf32, #tpu.memory_space<vmem>>, vector<1x256xf32>
    %16 = vector.broadcast %15 : vector<1x256xf32> to vector<16x256xf32>
    %17 = arith.addf %14, %16 : vector<16x256xf32>
    %18 = vector.extract_strided_slice %17 {offsets = [0, 0], sizes = [2, 256], strides = [1, 1]} : vector<16x256xf32> to vector<2x256xf32>
    %19 = vector.extract_strided_slice %17 {offsets = [2, 0], sizes = [2, 256], strides = [1, 1]} : vector<16x256xf32> to vector<2x256xf32>
    %20 = vector.extract_strided_slice %17 {offsets = [4, 0], sizes = [2, 256], strides = [1, 1]} : vector<16x256xf32> to vector<2x256xf32>
    %21 = vector.extract_strided_slice %17 {offsets = [6, 0], sizes = [2, 256], strides = [1, 1]} : vector<16x256xf32> to vector<2x256xf32>
    %22 = vector.extract_strided_slice %17 {offsets = [8, 0], sizes = [2, 256], strides = [1, 1]} : vector<16x256xf32> to vector<2x256xf32>
    %23 = vector.extract_strided_slice %17 {offsets = [10, 0], sizes = [2, 256], strides = [1, 1]} : vector<16x256xf32> to vector<2x256xf32>
    %24 = vector.extract_strided_slice %17 {offsets = [12, 0], sizes = [2, 256], strides = [1, 1]} : vector<16x256xf32> to vector<2x256xf32>
    %25 = vector.extract_strided_slice %17 {offsets = [14, 0], sizes = [2, 256], strides = [1, 1]} : vector<16x256xf32> to vector<2x256xf32>
    %c0_8 = arith.constant 0 : index
    %c0_9 = arith.constant 0 : index
    %26 = vector.load %arg4[%c0_8, %c0_9] : memref<64x256xf32, #tpu.memory_space<vmem>>, vector<64x256xf32>
    %cst_10 = arith.constant 0.000000e+00 : f32
    %27 = vector.broadcast %cst_10 : f32 to vector<2x64xf32>
    %cst_11 = arith.constant 0.000000e+00 : f32
    %28 = vector.broadcast %cst_11 : f32 to vector<2x64xf32>
    %cst_12 = arith.constant dense<0.000000e+00> : vector<2x256xf32>
    %29 = tpu.matmul %27, %26, %cst_12 {dimension_numbers = #tpu.dot_dimension_numbers<[1], [0], [0], [1], [0, 0, 1, 1], [], []>} : vector<2x64xf32>, vector<64x256xf32>, vector<2x256xf32> -> vector<2x256xf32>
    %30 = arith.addf %18, %29 : vector<2x256xf32>
    %31 = arith.negf %30 : vector<2x256xf32>
    %32 = math.exp %31 : vector<2x256xf32>
    %cst_13 = arith.constant 1.000000e+00 : f32
    %33 = vector.broadcast %cst_13 : f32 to vector<2x256xf32>
    %34 = arith.addf %33, %32 : vector<2x256xf32>
    %35 = arith.divf %33, %34 : vector<2x256xf32>
    %36 = vector.extract_strided_slice %35 {offsets = [0, 0], sizes = [2, 64], strides = [1, 1]} : vector<2x256xf32> to vector<2x64xf32>
    %37 = vector.extract_strided_slice %35 {offsets = [0, 64], sizes = [2, 64], strides = [1, 1]} : vector<2x256xf32> to vector<2x64xf32>
    %38 = vector.extract_strided_slice %35 {offsets = [0, 192], sizes = [2, 64], strides = [1, 1]} : vector<2x256xf32> to vector<2x64xf32>
    %39 = vector.extract_strided_slice %30 {offsets = [0, 128], sizes = [2, 64], strides = [1, 1]} : vector<2x256xf32> to vector<2x64xf32>
    %40 = math.tanh %39 : vector<2x64xf32>
    %41 = arith.mulf %37, %28 : vector<2x64xf32>
    %42 = arith.mulf %36, %40 : vector<2x64xf32>
    %43 = arith.addf %41, %42 : vector<2x64xf32>
    %44 = math.tanh %43 : vector<2x64xf32>
    %45 = arith.mulf %38, %44 : vector<2x64xf32>
    %cst_14 = arith.constant dense<0.000000e+00> : vector<2x256xf32>
    %46 = tpu.matmul %45, %26, %cst_14 {dimension_numbers = #tpu.dot_dimension_numbers<[1], [0], [0], [1], [0, 0, 1, 1], [], []>} : vector<2x64xf32>, vector<64x256xf32>, vector<2x256xf32> -> vector<2x256xf32>
    %47 = arith.addf %19, %46 : vector<2x256xf32>
    %48 = arith.negf %47 : vector<2x256xf32>
    %49 = math.exp %48 : vector<2x256xf32>
    %cst_15 = arith.constant 1.000000e+00 : f32
    %50 = vector.broadcast %cst_15 : f32 to vector<2x256xf32>
    %51 = arith.addf %50, %49 : vector<2x256xf32>
    %52 = arith.divf %50, %51 : vector<2x256xf32>
    %53 = vector.extract_strided_slice %52 {offsets = [0, 0], sizes = [2, 64], strides = [1, 1]} : vector<2x256xf32> to vector<2x64xf32>
    %54 = vector.extract_strided_slice %52 {offsets = [0, 64], sizes = [2, 64], strides = [1, 1]} : vector<2x256xf32> to vector<2x64xf32>
    %55 = vector.extract_strided_slice %52 {offsets = [0, 192], sizes = [2, 64], strides = [1, 1]} : vector<2x256xf32> to vector<2x64xf32>
    %56 = vector.extract_strided_slice %47 {offsets = [0, 128], sizes = [2, 64], strides = [1, 1]} : vector<2x256xf32> to vector<2x64xf32>
    %57 = math.tanh %56 : vector<2x64xf32>
    %58 = arith.mulf %54, %43 : vector<2x64xf32>
    %59 = arith.mulf %53, %57 : vector<2x64xf32>
    %60 = arith.addf %58, %59 : vector<2x64xf32>
    %61 = math.tanh %60 : vector<2x64xf32>
    %62 = arith.mulf %55, %61 : vector<2x64xf32>
    %cst_16 = arith.constant dense<0.000000e+00> : vector<2x256xf32>
    %63 = tpu.matmul %62, %26, %cst_16 {dimension_numbers = #tpu.dot_dimension_numbers<[1], [0], [0], [1], [0, 0, 1, 1], [], []>} : vector<2x64xf32>, vector<64x256xf32>, vector<2x256xf32> -> vector<2x256xf32>
    %64 = arith.addf %20, %63 : vector<2x256xf32>
    %65 = arith.negf %64 : vector<2x256xf32>
    %66 = math.exp %65 : vector<2x256xf32>
    %cst_17 = arith.constant 1.000000e+00 : f32
    %67 = vector.broadcast %cst_17 : f32 to vector<2x256xf32>
    %68 = arith.addf %67, %66 : vector<2x256xf32>
    %69 = arith.divf %67, %68 : vector<2x256xf32>
    %70 = vector.extract_strided_slice %69 {offsets = [0, 0], sizes = [2, 64], strides = [1, 1]} : vector<2x256xf32> to vector<2x64xf32>
    %71 = vector.extract_strided_slice %69 {offsets = [0, 64], sizes = [2, 64], strides = [1, 1]} : vector<2x256xf32> to vector<2x64xf32>
    %72 = vector.extract_strided_slice %69 {offsets = [0, 192], sizes = [2, 64], strides = [1, 1]} : vector<2x256xf32> to vector<2x64xf32>
    %73 = vector.extract_strided_slice %64 {offsets = [0, 128], sizes = [2, 64], strides = [1, 1]} : vector<2x256xf32> to vector<2x64xf32>
    %74 = math.tanh %73 : vector<2x64xf32>
    %75 = arith.mulf %71, %60 : vector<2x64xf32>
    %76 = arith.mulf %70, %74 : vector<2x64xf32>
    %77 = arith.addf %75, %76 : vector<2x64xf32>
    %78 = math.tanh %77 : vector<2x64xf32>
    %79 = arith.mulf %72, %78 : vector<2x64xf32>
    %cst_18 = arith.constant dense<0.000000e+00> : vector<2x256xf32>
    %80 = tpu.matmul %79, %26, %cst_18 {dimension_numbers = #tpu.dot_dimension_numbers<[1], [0], [0], [1], [0, 0, 1, 1], [], []>} : vector<2x64xf32>, vector<64x256xf32>, vector<2x256xf32> -> vector<2x256xf32>
    %81 = arith.addf %21, %80 : vector<2x256xf32>
    %82 = arith.negf %81 : vector<2x256xf32>
    %83 = math.exp %82 : vector<2x256xf32>
    %cst_19 = arith.constant 1.000000e+00 : f32
    %84 = vector.broadcast %cst_19 : f32 to vector<2x256xf32>
    %85 = arith.addf %84, %83 : vector<2x256xf32>
    %86 = arith.divf %84, %85 : vector<2x256xf32>
    %87 = vector.extract_strided_slice %86 {offsets = [0, 0], sizes = [2, 64], strides = [1, 1]} : vector<2x256xf32> to vector<2x64xf32>
    %88 = vector.extract_strided_slice %86 {offsets = [0, 64], sizes = [2, 64], strides = [1, 1]} : vector<2x256xf32> to vector<2x64xf32>
    %89 = vector.extract_strided_slice %86 {offsets = [0, 192], sizes = [2, 64], strides = [1, 1]} : vector<2x256xf32> to vector<2x64xf32>
    %90 = vector.extract_strided_slice %81 {offsets = [0, 128], sizes = [2, 64], strides = [1, 1]} : vector<2x256xf32> to vector<2x64xf32>
    %91 = math.tanh %90 : vector<2x64xf32>
    %92 = arith.mulf %88, %77 : vector<2x64xf32>
    %93 = arith.mulf %87, %91 : vector<2x64xf32>
    %94 = arith.addf %92, %93 : vector<2x64xf32>
    %95 = math.tanh %94 : vector<2x64xf32>
    %96 = arith.mulf %89, %95 : vector<2x64xf32>
    %cst_20 = arith.constant dense<0.000000e+00> : vector<2x256xf32>
    %97 = tpu.matmul %96, %26, %cst_20 {dimension_numbers = #tpu.dot_dimension_numbers<[1], [0], [0], [1], [0, 0, 1, 1], [], []>} : vector<2x64xf32>, vector<64x256xf32>, vector<2x256xf32> -> vector<2x256xf32>
    %98 = arith.addf %22, %97 : vector<2x256xf32>
    %99 = arith.negf %98 : vector<2x256xf32>
    %100 = math.exp %99 : vector<2x256xf32>
    %cst_21 = arith.constant 1.000000e+00 : f32
    %101 = vector.broadcast %cst_21 : f32 to vector<2x256xf32>
    %102 = arith.addf %101, %100 : vector<2x256xf32>
    %103 = arith.divf %101, %102 : vector<2x256xf32>
    %104 = vector.extract_strided_slice %103 {offsets = [0, 0], sizes = [2, 64], strides = [1, 1]} : vector<2x256xf32> to vector<2x64xf32>
    %105 = vector.extract_strided_slice %103 {offsets = [0, 64], sizes = [2, 64], strides = [1, 1]} : vector<2x256xf32> to vector<2x64xf32>
    %106 = vector.extract_strided_slice %103 {offsets = [0, 192], sizes = [2, 64], strides = [1, 1]} : vector<2x256xf32> to vector<2x64xf32>
    %107 = vector.extract_strided_slice %98 {offsets = [0, 128], sizes = [2, 64], strides = [1, 1]} : vector<2x256xf32> to vector<2x64xf32>
    %108 = math.tanh %107 : vector<2x64xf32>
    %109 = arith.mulf %105, %94 : vector<2x64xf32>
    %110 = arith.mulf %104, %108 : vector<2x64xf32>
    %111 = arith.addf %109, %110 : vector<2x64xf32>
    %112 = math.tanh %111 : vector<2x64xf32>
    %113 = arith.mulf %106, %112 : vector<2x64xf32>
    %cst_22 = arith.constant dense<0.000000e+00> : vector<2x256xf32>
    %114 = tpu.matmul %113, %26, %cst_22 {dimension_numbers = #tpu.dot_dimension_numbers<[1], [0], [0], [1], [0, 0, 1, 1], [], []>} : vector<2x64xf32>, vector<64x256xf32>, vector<2x256xf32> -> vector<2x256xf32>
    %115 = arith.addf %23, %114 : vector<2x256xf32>
    %116 = arith.negf %115 : vector<2x256xf32>
    %117 = math.exp %116 : vector<2x256xf32>
    %cst_23 = arith.constant 1.000000e+00 : f32
    %118 = vector.broadcast %cst_23 : f32 to vector<2x256xf32>
    %119 = arith.addf %118, %117 : vector<2x256xf32>
    %120 = arith.divf %118, %119 : vector<2x256xf32>
    %121 = vector.extract_strided_slice %120 {offsets = [0, 0], sizes = [2, 64], strides = [1, 1]} : vector<2x256xf32> to vector<2x64xf32>
    %122 = vector.extract_strided_slice %120 {offsets = [0, 64], sizes = [2, 64], strides = [1, 1]} : vector<2x256xf32> to vector<2x64xf32>
    %123 = vector.extract_strided_slice %120 {offsets = [0, 192], sizes = [2, 64], strides = [1, 1]} : vector<2x256xf32> to vector<2x64xf32>
    %124 = vector.extract_strided_slice %115 {offsets = [0, 128], sizes = [2, 64], strides = [1, 1]} : vector<2x256xf32> to vector<2x64xf32>
    %125 = math.tanh %124 : vector<2x64xf32>
    %126 = arith.mulf %122, %111 : vector<2x64xf32>
    %127 = arith.mulf %121, %125 : vector<2x64xf32>
    %128 = arith.addf %126, %127 : vector<2x64xf32>
    %129 = math.tanh %128 : vector<2x64xf32>
    %130 = arith.mulf %123, %129 : vector<2x64xf32>
    %cst_24 = arith.constant dense<0.000000e+00> : vector<2x256xf32>
    %131 = tpu.matmul %130, %26, %cst_24 {dimension_numbers = #tpu.dot_dimension_numbers<[1], [0], [0], [1], [0, 0, 1, 1], [], []>} : vector<2x64xf32>, vector<64x256xf32>, vector<2x256xf32> -> vector<2x256xf32>
    %132 = arith.addf %24, %131 : vector<2x256xf32>
    %133 = arith.negf %132 : vector<2x256xf32>
    %134 = math.exp %133 : vector<2x256xf32>
    %cst_25 = arith.constant 1.000000e+00 : f32
    %135 = vector.broadcast %cst_25 : f32 to vector<2x256xf32>
    %136 = arith.addf %135, %134 : vector<2x256xf32>
    %137 = arith.divf %135, %136 : vector<2x256xf32>
    %138 = vector.extract_strided_slice %137 {offsets = [0, 0], sizes = [2, 64], strides = [1, 1]} : vector<2x256xf32> to vector<2x64xf32>
    %139 = vector.extract_strided_slice %137 {offsets = [0, 64], sizes = [2, 64], strides = [1, 1]} : vector<2x256xf32> to vector<2x64xf32>
    %140 = vector.extract_strided_slice %137 {offsets = [0, 192], sizes = [2, 64], strides = [1, 1]} : vector<2x256xf32> to vector<2x64xf32>
    %141 = vector.extract_strided_slice %132 {offsets = [0, 128], sizes = [2, 64], strides = [1, 1]} : vector<2x256xf32> to vector<2x64xf32>
    %142 = math.tanh %141 : vector<2x64xf32>
    %143 = arith.mulf %139, %128 : vector<2x64xf32>
    %144 = arith.mulf %138, %142 : vector<2x64xf32>
    %145 = arith.addf %143, %144 : vector<2x64xf32>
    %146 = math.tanh %145 : vector<2x64xf32>
    %147 = arith.mulf %140, %146 : vector<2x64xf32>
    %cst_26 = arith.constant dense<0.000000e+00> : vector<2x256xf32>
    %148 = tpu.matmul %147, %26, %cst_26 {dimension_numbers = #tpu.dot_dimension_numbers<[1], [0], [0], [1], [0, 0, 1, 1], [], []>} : vector<2x64xf32>, vector<64x256xf32>, vector<2x256xf32> -> vector<2x256xf32>
    %149 = arith.addf %25, %148 : vector<2x256xf32>
    %150 = arith.negf %149 : vector<2x256xf32>
    %151 = math.exp %150 : vector<2x256xf32>
    %cst_27 = arith.constant 1.000000e+00 : f32
    %152 = vector.broadcast %cst_27 : f32 to vector<2x256xf32>
    %153 = arith.addf %152, %151 : vector<2x256xf32>
    %154 = arith.divf %152, %153 : vector<2x256xf32>
    %155 = vector.extract_strided_slice %154 {offsets = [0, 0], sizes = [2, 64], strides = [1, 1]} : vector<2x256xf32> to vector<2x64xf32>
    %156 = vector.extract_strided_slice %154 {offsets = [0, 64], sizes = [2, 64], strides = [1, 1]} : vector<2x256xf32> to vector<2x64xf32>
    %157 = vector.extract_strided_slice %154 {offsets = [0, 192], sizes = [2, 64], strides = [1, 1]} : vector<2x256xf32> to vector<2x64xf32>
    %158 = vector.extract_strided_slice %149 {offsets = [0, 128], sizes = [2, 64], strides = [1, 1]} : vector<2x256xf32> to vector<2x64xf32>
    %159 = math.tanh %158 : vector<2x64xf32>
    %160 = arith.mulf %156, %145 : vector<2x64xf32>
    %161 = arith.mulf %155, %159 : vector<2x64xf32>
    %162 = arith.addf %160, %161 : vector<2x64xf32>
    %163 = math.tanh %162 : vector<2x64xf32>
    %164 = arith.mulf %157, %163 : vector<2x64xf32>
    %165 = vector.extract_strided_slice %45 {offsets = [0, 0], sizes = [2, 32], strides = [1, 1]} : vector<2x64xf32> to vector<2x32xf32>
    %166 = vector.extract_strided_slice %62 {offsets = [0, 0], sizes = [2, 32], strides = [1, 1]} : vector<2x64xf32> to vector<2x32xf32>
    %167 = vector.extract_strided_slice %79 {offsets = [0, 0], sizes = [2, 32], strides = [1, 1]} : vector<2x64xf32> to vector<2x32xf32>
    %168 = vector.extract_strided_slice %96 {offsets = [0, 0], sizes = [2, 32], strides = [1, 1]} : vector<2x64xf32> to vector<2x32xf32>
    %169 = vector.extract_strided_slice %113 {offsets = [0, 0], sizes = [2, 32], strides = [1, 1]} : vector<2x64xf32> to vector<2x32xf32>
    %170 = vector.extract_strided_slice %130 {offsets = [0, 0], sizes = [2, 32], strides = [1, 1]} : vector<2x64xf32> to vector<2x32xf32>
    %171 = vector.extract_strided_slice %147 {offsets = [0, 0], sizes = [2, 32], strides = [1, 1]} : vector<2x64xf32> to vector<2x32xf32>
    %172 = vector.extract_strided_slice %164 {offsets = [0, 0], sizes = [2, 32], strides = [1, 1]} : vector<2x64xf32> to vector<2x32xf32>
    %173 = tpu.concatenate %165, %166, %167, %168, %169, %170, %171, %172 in 0 : vector<2x32xf32>, vector<2x32xf32>, vector<2x32xf32>, vector<2x32xf32>, vector<2x32xf32>, vector<2x32xf32>, vector<2x32xf32>, vector<2x32xf32> -> vector<16x32xf32>
    %174 = vector.extract_strided_slice %164 {offsets = [0, 32], sizes = [2, 32], strides = [1, 1]} : vector<2x64xf32> to vector<2x32xf32>
    %175 = vector.extract_strided_slice %147 {offsets = [0, 32], sizes = [2, 32], strides = [1, 1]} : vector<2x64xf32> to vector<2x32xf32>
    %176 = vector.extract_strided_slice %130 {offsets = [0, 32], sizes = [2, 32], strides = [1, 1]} : vector<2x64xf32> to vector<2x32xf32>
    %177 = vector.extract_strided_slice %113 {offsets = [0, 32], sizes = [2, 32], strides = [1, 1]} : vector<2x64xf32> to vector<2x32xf32>
    %178 = vector.extract_strided_slice %96 {offsets = [0, 32], sizes = [2, 32], strides = [1, 1]} : vector<2x64xf32> to vector<2x32xf32>
    %179 = vector.extract_strided_slice %79 {offsets = [0, 32], sizes = [2, 32], strides = [1, 1]} : vector<2x64xf32> to vector<2x32xf32>
    %180 = vector.extract_strided_slice %62 {offsets = [0, 32], sizes = [2, 32], strides = [1, 1]} : vector<2x64xf32> to vector<2x32xf32>
    %181 = vector.extract_strided_slice %45 {offsets = [0, 32], sizes = [2, 32], strides = [1, 1]} : vector<2x64xf32> to vector<2x32xf32>
    %182 = tpu.concatenate %174, %175, %176, %177, %178, %179, %180, %181 in 0 : vector<2x32xf32>, vector<2x32xf32>, vector<2x32xf32>, vector<2x32xf32>, vector<2x32xf32>, vector<2x32xf32>, vector<2x32xf32>, vector<2x32xf32> -> vector<16x32xf32>
    %cst_28 = arith.constant 0.000000e+00 : f32
    %183 = vector.broadcast %cst_28 : f32 to vector<16x32xf32>
    %184 = vector.extract_strided_slice %12 {offsets = [0, 0], sizes = [16, 32], strides = [1, 1]} : vector<16x64xf32> to vector<16x32xf32>
    %185 = tpu.concatenate %184, %173, %182, %183 in 1 : vector<16x32xf32>, vector<16x32xf32>, vector<16x32xf32>, vector<16x32xf32> -> vector<16x128xf32>
    %c0_29 = arith.constant 0 : index
    %c0_30 = arith.constant 0 : index
    %186 = vector.load %arg10[%c0_29, %c0_30] : memref<16x128xf32, #tpu.memory_space<vmem>>, vector<16x128xf32>
    tpu.vector_store %arg10[%c0_29, %c0_30], %185 {strides = array<i32>} : memref<16x128xf32, #tpu.memory_space<vmem>>, vector<16x128xf32>,
    %cst_31 = arith.constant 0.000000e+00 : f32
    %187 = vector.broadcast %cst_31 : f32 to vector<12x128xf32>
    %c0_32 = arith.constant 0 : index
    %c0_33 = arith.constant 0 : index
    %188 = vector.load %arg10[%c0_32, %c0_33] : memref<16x128xf32, #tpu.memory_space<vmem>>, vector<12x128xf32>
    %c0_34 = arith.constant 0 : index
    %c0_35 = arith.constant 0 : index
    %189 = vector.load %arg5[%c0_34, %c0_35] : memref<384x128xf32, #tpu.memory_space<vmem>>, vector<128x128xf32>
    %cst_36 = arith.constant dense<0.000000e+00> : vector<12x128xf32>
    %190 = tpu.matmul %188, %189, %cst_36 {dimension_numbers = #tpu.dot_dimension_numbers<[1], [0], [0], [1], [0, 0, 1, 1], [], []>} : vector<12x128xf32>, vector<128x128xf32>, vector<12x128xf32> -> vector<12x128xf32>
    %191 = arith.addf %187, %190 : vector<12x128xf32>
    %c2 = arith.constant 2 : index
    %c0_37 = arith.constant 0 : index
    %192 = vector.load %arg10[%c2, %c0_37] : memref<16x128xf32, #tpu.memory_space<vmem>>, vector<12x128xf32>
    %c128 = arith.constant 128 : index
    %c0_38 = arith.constant 0 : index
    %193 = vector.load %arg5[%c128, %c0_38] : memref<384x128xf32, #tpu.memory_space<vmem>>, vector<128x128xf32>
    %cst_39 = arith.constant dense<0.000000e+00> : vector<12x128xf32>
    %194 = tpu.matmul %192, %193, %cst_39 {dimension_numbers = #tpu.dot_dimension_numbers<[1], [0], [0], [1], [0, 0, 1, 1], [], []>} : vector<12x128xf32>, vector<128x128xf32>, vector<12x128xf32> -> vector<12x128xf32>
    %195 = arith.addf %191, %194 : vector<12x128xf32>
    %c4 = arith.constant 4 : index
    %c0_40 = arith.constant 0 : index
    %196 = vector.load %arg10[%c4, %c0_40] : memref<16x128xf32, #tpu.memory_space<vmem>>, vector<12x128xf32>
    %c256 = arith.constant 256 : index
    %c0_41 = arith.constant 0 : index
    %197 = vector.load %arg5[%c256, %c0_41] : memref<384x128xf32, #tpu.memory_space<vmem>>, vector<128x128xf32>
    %cst_42 = arith.constant dense<0.000000e+00> : vector<12x128xf32>
    %198 = tpu.matmul %196, %197, %cst_42 {dimension_numbers = #tpu.dot_dimension_numbers<[1], [0], [0], [1], [0, 0, 1, 1], [], []>} : vector<12x128xf32>, vector<128x128xf32>, vector<12x128xf32> -> vector<12x128xf32>
    %199 = arith.addf %195, %198 : vector<12x128xf32>
    %c0_43 = arith.constant 0 : index
    %c0_44 = arith.constant 0 : index
    %200 = vector.load %arg6[%c0_43, %c0_44] : memref<1x128xf32, #tpu.memory_space<vmem>>, vector<1x128xf32>
    %201 = vector.broadcast %200 : vector<1x128xf32> to vector<12x128xf32>
    %202 = arith.addf %199, %201 : vector<12x128xf32>
    %cst_45 = arith.constant 0.000000e+00 : f32
    %203 = vector.broadcast %cst_45 : f32 to vector<12x128xf32>
    %204 = arith.maximumf %202, %203 : vector<12x128xf32>
    %cst_46 = arith.constant 0.000000e+00 : f32
    %205 = vector.broadcast %cst_46 : f32 to vector<2x128xf32>
    %206 = vector.extract_strided_slice %204 {offsets = [0, 0], sizes = [2, 128], strides = [1, 1]} : vector<12x128xf32> to vector<2x128xf32>
    %207 = vector.extract_strided_slice %204 {offsets = [2, 0], sizes = [2, 128], strides = [1, 1]} : vector<12x128xf32> to vector<2x128xf32>
    %208 = arith.maximumf %206, %207 : vector<2x128xf32>
    %209 = vector.extract_strided_slice %204 {offsets = [4, 0], sizes = [2, 128], strides = [1, 1]} : vector<12x128xf32> to vector<2x128xf32>
    %210 = arith.maximumf %208, %209 : vector<2x128xf32>
    %211 = arith.addf %205, %210 : vector<2x128xf32>
    %212 = vector.extract_strided_slice %204 {offsets = [4, 0], sizes = [2, 128], strides = [1, 1]} : vector<12x128xf32> to vector<2x128xf32>
    %213 = vector.extract_strided_slice %204 {offsets = [6, 0], sizes = [2, 128], strides = [1, 1]} : vector<12x128xf32> to vector<2x128xf32>
    %214 = arith.maximumf %212, %213 : vector<2x128xf32>
    %215 = vector.extract_strided_slice %204 {offsets = [8, 0], sizes = [2, 128], strides = [1, 1]} : vector<12x128xf32> to vector<2x128xf32>
    %216 = arith.maximumf %214, %215 : vector<2x128xf32>
    %217 = arith.addf %211, %216 : vector<2x128xf32>
    %cst_47 = arith.constant 5.000000e-01 : f32
    %218 = vector.broadcast %cst_47 : f32 to vector<2x128xf32>
    %219 = arith.mulf %217, %218 : vector<2x128xf32>
    %c0_48 = arith.constant 0 : index
    %c0_49 = arith.constant 0 : index
    %220 = vector.load %arg7[%c0_48, %c0_49] : memref<128x10xf32, #tpu.memory_space<vmem>>, vector<128x10xf32>
    %cst_50 = arith.constant dense<0.000000e+00> : vector<2x10xf32>
    %221 = tpu.matmul %219, %220, %cst_50 {dimension_numbers = #tpu.dot_dimension_numbers<[1], [0], [0], [1], [0, 0, 1, 1], [], []>} : vector<2x128xf32>, vector<128x10xf32>, vector<2x10xf32> -> vector<2x10xf32>
    %c0_51 = arith.constant 0 : index
    %c0_52 = arith.constant 0 : index
    %222 = vector.load %arg8[%c0_51, %c0_52] : memref<1x10xf32, #tpu.memory_space<vmem>>, vector<1x10xf32>
    %223 = vector.broadcast %222 : vector<1x10xf32> to vector<2x10xf32>
    %224 = arith.addf %221, %223 : vector<2x10xf32>
    %c0_53 = arith.constant 0 : index
    %c0_54 = arith.constant 0 : index
    %225 = vector.load %arg9[%c0_53, %c0_54] : memref<2x10xf32, #tpu.memory_space<vmem>>, vector<2x10xf32>
    tpu.vector_store %arg9[%c0_53, %c0_54], %224 {strides = array<i32>} : memref<2x10xf32, #tpu.memory_space<vmem>>, vector<2x10xf32>,
    return
  }
}

</mosaic_0001>

<llo_original>
// kernel: _rcnn_forward_impl.1
$region0: #{_rcnn_forward_impl.1}
  #allocation0 [shape = 'u32[]', space=smem, size = 0x4, offset = 0x4, fixed_abs, tag = 'smem constant byte address 0x4 - core index']
  #allocation1 [shape = 'u32[144,128]{1,0:T(1,128)}', space=vmem, size = 0x12000, scoped, tag = 'internal scratch']
  #allocation2 [shape = 'f32[16,128]{1,0:T(8,128)}', space=vmem, size = 0x2000, scoped, tag = 'scratch operand']
  %s0 = inlined_call_operand.vmem [shape: s32[16,2], index: 0, kind: input, shape index: {}]
  %s1 = inlined_call_operand.vmem [shape: f32[128,64], index: 1, kind: input, shape index: {}]
  %s2 = inlined_call_operand.hbm [shape: f32[64,256], index: 2, kind: input, shape index: {}]
  %s3 = inlined_call_operand.vmem [shape: f32[1,256], index: 3, kind: input, shape index: {}]
  %s4 = inlined_call_operand.hbm [shape: f32[64,256], index: 4, kind: input, shape index: {}]
  %s5 = inlined_call_operand.vmem [shape: f32[384,128], index: 5, kind: input, shape index: {}]
  %s6 = inlined_call_operand.vmem [shape: f32[1,128], index: 6, kind: input, shape index: {}]
  %s7 = inlined_call_operand.vmem [shape: f32[128,10], index: 7, kind: input, shape index: {}]
  %s8 = inlined_call_operand.vmem [shape: f32[1,10], index: 8, kind: input, shape index: {}]
  %s9 = inlined_call_operand.hbm [shape: f32[2,10], index: 9, kind: output, shape index: {}]
  %s10 = sld [smem:[#allocation0]]
  $region54: #{_rcnn_forward_impl.1} parent=0
    _
  %s12 = ssub.s32 1, %s10
  %s13 = scalar_select 0, %s12, %s10
  $region1: #{_rcnn_forward_impl.1} parent=0
    #allocation3 [shape = 'u8[65536]{0}', space=vmem, size = 0x10000, scoped, tag = 'input window, operand 2, single buffered']
    #allocation4 [shape = 's32[1]{0}', space=sflag, size = 0x4, scoped, tag = 'scoped memory for _rcnn_forward_impl.1']
    #allocation5 [shape = 's32[1]{0}', space=sflag, size = 0x4, scoped, tag = 'scoped memory for _rcnn_forward_impl.1']
    #allocation6 [shape = 'u8[65536]{0}', space=vmem, size = 0x10000, scoped, tag = 'input window, operand 4, single buffered']
    #allocation7 [shape = 's32[1]{0}', space=sflag, size = 0x4, scoped, tag = 'scoped memory for _rcnn_forward_impl.1']
    #allocation8 [shape = 'u8[1024]{0}', space=vmem, size = 0x400, scoped, tag = 'output window, operand 0, single buffered']
    %14 = vsyncpa [#allocation4], 0
    %15 = vsyncpa [#allocation7], 0
    %16 = vsyncpa [#allocation5], 0
    // Predicated region
    $region2: #{_rcnn_forward_impl.1} parent=1 // pred_check
      _
    $region3: #{_rcnn_forward_impl.1} parent=1 // pred_check_branch
      %18 = sbr.rel (0) target = $region5
    $region4: #{_rcnn_forward_impl.1} parent=1 // pred_region
      _
    $region5: #{_rcnn_forward_impl.1} parent=1 // pred_fallthru
      _
    // Predicated region
    $region6: #{_rcnn_forward_impl.1} parent=1 // pred_check
      _
    $region7: #{_rcnn_forward_impl.1} parent=1 // pred_check_branch
      %20 = sbr.rel (0) target = $region9
    $region8: #{_rcnn_forward_impl.1} parent=1 // pred_region
      _
    $region9: #{_rcnn_forward_impl.1} parent=1 // pred_fallthru
      _
    // Predicated region
    $region10: #{_rcnn_forward_impl.1} parent=1 // pred_check
      _
    $region11: #{_rcnn_forward_impl.1} parent=1 // pred_check_branch
      %22 = sbr.rel (0) target = $region13
    $region12: #{_rcnn_forward_impl.1} parent=1 // pred_region
      %s24 = ssub.s32 2048, 2048
      %25 = vsyncadd [#allocation4], %s24
      %s26 = sshll.u32 [#allocation3], 4
      %s27 = int_to_ptr.vmem [resolvable:$true] %s26
      %32 = dma.hbm_to_vmem [thread:$0]  %s2, 2048, %s27, [#allocation4], 256, 256, 16
    $region13: #{_rcnn_forward_impl.1} parent=1 // pred_fallthru
      _
    // Predicated region
    $region14: #{_rcnn_forward_impl.1} parent=1 // pred_check
      _
    $region15: #{_rcnn_forward_impl.1} parent=1 // pred_check_branch
      %34 = sbr.rel (0) target = $region17
    $region16: #{_rcnn_forward_impl.1} parent=1 // pred_region
      _
    $region17: #{_rcnn_forward_impl.1} parent=1 // pred_fallthru
      _
    // Predicated region
    $region18: #{_rcnn_forward_impl.1} parent=1 // pred_check
      _
    $region19: #{_rcnn_forward_impl.1} parent=1 // pred_check_branch
      %36 = sbr.rel (0) target = $region21
    $region20: #{_rcnn_forward_impl.1} parent=1 // pred_region
      %s38 = ssub.s32 2048, 2048
      %39 = vsyncadd [#allocation7], %s38
      %s40 = sshll.u32 [#allocation6], 4
      %s41 = int_to_ptr.vmem [resolvable:$true] %s40
      %46 = dma.hbm_to_vmem [thread:$0]  %s4, 2048, %s41, [#allocation7], 256, 256, 16
    $region21: #{_rcnn_forward_impl.1} parent=1 // pred_fallthru
      _
    // Predicated region
    $region22: #{_rcnn_forward_impl.1} parent=1 // pred_check
      _
    $region23: #{_rcnn_forward_impl.1} parent=1 // pred_check_branch
      %48 = sbr.rel (0) target = $region25
    $region24: #{_rcnn_forward_impl.1} parent=1 // pred_region
      _
    $region25: #{_rcnn_forward_impl.1} parent=1 // pred_fallthru
      _
    // Predicated region
    $region26: #{_rcnn_forward_impl.1} parent=1 // pred_check
      _
    $region27: #{_rcnn_forward_impl.1} parent=1 // pred_check_branch
      %50 = sbr.rel (0) target = $region29
    $region28: #{_rcnn_forward_impl.1} parent=1 // pred_region
      _
    $region29: #{_rcnn_forward_impl.1} parent=1 // pred_fallthru
      _
    // Predicated region
    $region30: #{_rcnn_forward_impl.1} parent=1 // pred_check
      _
    $region31: #{_rcnn_forward_impl.1} parent=1 // pred_check_branch
      %52 = sbr.rel (0) target = $region33
    $region32: #{_rcnn_forward_impl.1} parent=1 // pred_region
      _
    $region33: #{_rcnn_forward_impl.1} parent=1 // pred_fallthru
      _
    // Predicated region
    $region34: #{_rcnn_forward_impl.1} parent=1 // pred_check
      _
    $region35: #{_rcnn_forward_impl.1} parent=1 // pred_check_branch
      %54 = sbr.rel (0) target = $region37
    $region36: #{_rcnn_forward_impl.1} parent=1 // pred_region
      _
    $region37: #{_rcnn_forward_impl.1} parent=1 // pred_fallthru
      _
    // Predicated region
    $region38: #{_rcnn_forward_impl.1} parent=1 // pred_check
      _
    $region39: #{_rcnn_forward_impl.1} parent=1 // pred_check_branch
      %56 = sbr.rel (0) target = $region41
    $region40: #{_rcnn_forward_impl.1} parent=1 // pred_region
      %57 = dma.done [#allocation4], 2048
    $region41: #{_rcnn_forward_impl.1} parent=1 // pred_fallthru
      _
    // Predicated region
    $region42: #{_rcnn_forward_impl.1} parent=1 // pred_check
      _
    $region43: #{_rcnn_forward_impl.1} parent=1 // pred_check_branch
      %59 = sbr.rel (0) target = $region45
    $region44: #{_rcnn_forward_impl.1} parent=1 // pred_region
      %60 = dma.done [#allocation7], 2048
    $region45: #{_rcnn_forward_impl.1} parent=1 // pred_fallthru
      _
    %v61 = vld [vmem:[%s0] sm:$0xff]
    %v62 = vld [vmem:[%s0 + $0x8] sm:$0xff]
    %v63 = vlaneseq
    %v64 = vand.u32 %v63, 127
    %65 = vset.pattern.permute.xlu0 0
    %66 = vperm.xlu0 %65, %v61
    %v67 = vpop.permute.xlu0 %66
    %68 = vset.pattern.permute.xlu0 0
    %69 = vperm.xlu0 %68, %v62
    %v70 = vpop.permute.xlu0 %69
    %vm71 = vcmp.eq.s32.totalorder %v64, %v67
    %vm72 = vcmp.eq.s32.totalorder %v64, %v70
    %73 = vset.pattern.permute.xlu0 1
    %74 = vperm.xlu0 %73, %v61
    %v75 = vpop.permute.xlu0 %74
    %76 = vset.pattern.permute.xlu0 1
    %77 = vperm.xlu0 %76, %v62
    %v78 = vpop.permute.xlu0 %77
    %vm79 = vcmp.eq.s32.totalorder %v64, %v75
    %vm80 = vcmp.eq.s32.totalorder %v64, %v78
    %vm81 = vmor %vm71, %vm79
    %vm82 = vmor %vm72, %vm80
    %v83 = vsel %vm81, 1, 0
    %v84 = vsel %vm82, 1, 0
    %v85 = vcvt.s32.f32 %v83
    %v86 = vcvt.s32.f32 %v84
    %v87 = vld [vmem:[%s1] sm:$0xff]
    %v88 = vld [vmem:[%s1 + $0x8] sm:$0xff]
    %v89 = vld [vmem:[%s1 + $0x10] sm:$0xff]
    %v90 = vld [vmem:[%s1 + $0x18] sm:$0xff]
    %v91 = vld [vmem:[%s1 + $0x20] sm:$0xff]
    %v92 = vld [vmem:[%s1 + $0x28] sm:$0xff]
    %v93 = vld [vmem:[%s1 + $0x30] sm:$0xff]
    %v94 = vld [vmem:[%s1 + $0x38] sm:$0xff]
    %v95 = vld [vmem:[%s1 + $0x40] sm:$0xff]
    %v96 = vld [vmem:[%s1 + $0x48] sm:$0xff]
    %v97 = vld [vmem:[%s1 + $0x50] sm:$0xff]
    %v98 = vld [vmem:[%s1 + $0x58] sm:$0xff]
    %v99 = vld [vmem:[%s1 + $0x60] sm:$0xff]
    %v100 = vld [vmem:[%s1 + $0x68] sm:$0xff]
    %v101 = vld [vmem:[%s1 + $0x70] sm:$0xff]
    %v102 = vld [vmem:[%s1 + $0x78] sm:$0xff]
    %103 = vmatprep.subr.mxu0 0.0
    %104 = vmatpush1.msra.mxu0 %v102
    %105 = vmatprep.subr.mxu0 0.0
    %106 = vmatpush1.msra.mxu0 %v101
    %107 = vmatprep.subr.mxu0 0.0
    %108 = vmatpush1.msra.mxu0 %v100
    %109 = vmatprep.subr.mxu0 0.0
    %110 = vmatpush1.msra.mxu0 %v99
    %111 = vmatprep.subr.mxu0 0.0
    %112 = vmatpush1.msra.mxu0 %v98
    %113 = vmatprep.subr.mxu0 0.0
    %114 = vmatpush1.msra.mxu0 %v97
    %115 = vmatprep.subr.mxu0 0.0
    %116 = vmatpush1.msra.mxu0 %v96
    %117 = vmatprep.subr.mxu0 0.0
    %118 = vmatpush1.msra.mxu0 %v95
    %119 = vmatprep.subr.mxu0 0.0
    %120 = vmatpush1.msra.mxu0 %v94
    %121 = vmatprep.subr.mxu0 0.0
    %122 = vmatpush1.msra.mxu0 %v93
    %123 = vmatprep.subr.mxu0 0.0
    %124 = vmatpush1.msra.mxu0 %v92
    %125 = vmatprep.subr.mxu0 0.0
    %126 = vmatpush1.msra.mxu0 %v91
    %127 = vmatprep.subr.mxu0 0.0
    %128 = vmatpush1.msra.mxu0 %v90
    %129 = vmatprep.subr.mxu0 0.0
    %130 = vmatpush1.msra.mxu0 %v89
    %131 = vmatprep.subr.mxu0 0.0
    %132 = vmatpush1.msra.mxu0 %v88
    %133 = vmatprep.subr.mxu0 0.0
    %134 = vmatpush1.msra.mxu0 %v87
    %135 = vmatprep.subr.mxu0 0.0
    %136 = vmatpush2.msra.mxu0 0.0
    %137 = vmatprep.subr.mxu0 0.0
    %138 = vmatpush2.msra.mxu0 0.0
    %139 = vmatprep.subr.mxu0 0.0
    %140 = vmatpush2.msra.mxu0 0.0
    %141 = vmatprep.subr.mxu0 0.0
    %142 = vmatpush2.msra.mxu0 0.0
    %143 = vmatprep.subr.mxu0 0.0
    %144 = vmatpush2.msra.mxu0 0.0
    %145 = vmatprep.subr.mxu0 0.0
    %146 = vmatpush2.msra.mxu0 0.0
    %147 = vmatprep.subr.mxu0 0.0
    %148 = vmatpush2.msra.mxu0 0.0
    %149 = vmatprep.subr.mxu0 0.0
    %150 = vmatpush2.msra.mxu0 0.0
    %151 = vmatprep.subr.mxu0 0.0
    %152 = vmatpush2.msra.mxu0 0.0
    %153 = vmatprep.subr.mxu0 0.0
    %154 = vmatpush2.msra.mxu0 0.0
    %155 = vmatprep.subr.mxu0 0.0
    %156 = vmatpush2.msra.mxu0 0.0
    %157 = vmatprep.subr.mxu0 0.0
    %158 = vmatpush2.msra.mxu0 0.0
    %159 = vmatprep.subr.mxu0 0.0
    %160 = vmatpush2.msra.mxu0 0.0
    %161 = vmatprep.subr.mxu0 0.0
    %162 = vmatpush2.msra.mxu0 0.0
    %163 = vmatprep.subr.mxu0 0.0
    %164 = vmatpush2.msra.mxu0 0.0
    %165 = vmatprep.subr.mxu0 0.0
    %166 = vmatpush2.msra.mxu0 0.0
    %167 = vmatprep.mubr.f32.mxu0 0.0
    %168 = vmatmul.mubr.f32.gmra.mxu0 %v85
    %v169 = vpop.f32.mrf.mxu0
    %v170 = vadd.f32 0.0, %v169
    %v171 = vpop.f32.mrf.mxu0
    %172 = vmatprep.mubr.f32.mxu0 0.0
    %173 = vmatmul.mubr.f32.gmra.mxu0 %v86
    %v174 = vpop.f32.mrf.mxu0
    %v175 = vadd.f32 0.0, %v174
    %v176 = vpop.f32.mrf.mxu0
    %177 = vdwg.mxu0
    %v178 = vld [vmem:[#allocation3] sm:$0xff]
    %v179 = vld [vmem:[#allocation3 + $0x8] sm:$0xff]
    %v180 = vld [vmem:[#allocation3 + $0x10] sm:$0xff]
    %v181 = vld [vmem:[#allocation3 + $0x18] sm:$0xff]
    %v182 = vld [vmem:[#allocation3 + $0x20] sm:$0xff]
    %v183 = vld [vmem:[#allocation3 + $0x28] sm:$0xff]
    %v184 = vld [vmem:[#allocation3 + $0x30] sm:$0xff]
    %v185 = vld [vmem:[#allocation3 + $0x38] sm:$0xff]
    %v186 = vld [vmem:[#allocation3 + $0x40] sm:$0xff]
    %v187 = vld [vmem:[#allocation3 + $0x48] sm:$0xff]
    %v188 = vld [vmem:[#allocation3 + $0x50] sm:$0xff]
    %v189 = vld [vmem:[#allocation3 + $0x58] sm:$0xff]
    %v190 = vld [vmem:[#allocation3 + $0x60] sm:$0xff]
    %v191 = vld [vmem:[#allocation3 + $0x68] sm:$0xff]
    %v192 = vld [vmem:[#allocation3 + $0x70] sm:$0xff]
    %v193 = vld [vmem:[#allocation3 + $0x78] sm:$0xff]
    %v194 = vld [vmem:[%s3] sm:$0x3]
    %v196 = vlaneseq
    %v197 = vshrl.u32 %v196, 7
    %v198 = vsub.s32 0, %v197
    %v199 = vrot.slane %v194, %v198
    %v200 = vlaneseq
    %v201 = vshrl.u32 %v200, 7
    %v202 = vsub.s32 1, %v201
    %v203 = vrot.slane %v194, %v202
    %vm206 = vcmask 523264
    %v208 = vsel %vm206, %v170, 0
    %v211 = vsel %vm206, %v175, 0
    %213 = vmatprep.subr.mxu0 0.0
    %214 = vmatpush1.msra.mxu0 0.0
    %215 = vmatprep.subr.mxu0 0.0
    %216 = vmatpush1.msra.mxu0 0.0
    %217 = vmatprep.subr.mxu0 0.0
    %218 = vmatpush1.msra.mxu0 0.0
    %219 = vmatprep.subr.mxu0 0.0
    %220 = vmatpush1.msra.mxu0 0.0
    %221 = vmatprep.subr.mxu0 0.0
    %222 = vmatpush1.msra.mxu0 0.0
    %223 = vmatprep.subr.mxu0 0.0
    %224 = vmatpush1.msra.mxu0 0.0
    %225 = vmatprep.subr.mxu0 0.0
    %226 = vmatpush1.msra.mxu0 0.0
    %227 = vmatprep.subr.mxu0 0.0
    %228 = vmatpush1.msra.mxu0 0.0
    %229 = vmatprep.subr.mxu0 %v193
    %230 = vmatpush1.msra.mxu0 %v192
    %231 = vmatprep.subr.mxu0 %v191
    %232 = vmatpush1.msra.mxu0 %v190
    %233 = vmatprep.subr.mxu0 %v189
    %234 = vmatpush1.msra.mxu0 %v188
    %235 = vmatprep.subr.mxu0 %v187
    %236 = vmatpush1.msra.mxu0 %v186
    %237 = vmatprep.subr.mxu0 %v185
    %238 = vmatpush1.msra.mxu0 %v184
    %239 = vmatprep.subr.mxu0 %v183
    %240 = vmatpush1.msra.mxu0 %v182
    %241 = vmatprep.subr.mxu0 %v181
    %242 = vmatpush1.msra.mxu0 %v180
    %243 = vmatprep.subr.mxu0 %v179
    %244 = vmatpush1.msra.mxu0 %v178
    %245 = vmatprep.subr.mxu0 0.0
    %246 = vmatpush2.msra.mxu0 0.0
    %247 = vmatprep.subr.mxu0 0.0
    %248 = vmatpush2.msra.mxu0 0.0
    %249 = vmatprep.subr.mxu0 0.0
    %250 = vmatpush2.msra.mxu0 0.0
    %251 = vmatprep.subr.mxu0 0.0
    %252 = vmatpush2.msra.mxu0 0.0
    %253 = vmatprep.subr.mxu0 0.0
    %254 = vmatpush2.msra.mxu0 0.0
    %255 = vmatprep.subr.mxu0 0.0
    %256 = vmatpush2.msra.mxu0 0.0
    %257 = vmatprep.subr.mxu0 0.0
    %258 = vmatpush2.msra.mxu0 0.0
    %259 = vmatprep.subr.mxu0 0.0
    %260 = vmatpush2.msra.mxu0 0.0
    %261 = vmatprep.subr.mxu0 0.0
    %262 = vmatpush2.msra.mxu0 0.0
    %263 = vmatprep.subr.mxu0 0.0
    %264 = vmatpush2.msra.mxu0 0.0
    %265 = vmatprep.subr.mxu0 0.0
    %266 = vmatpush2.msra.mxu0 0.0
    %267 = vmatprep.subr.mxu0 0.0
    %268 = vmatpush2.msra.mxu0 0.0
    %269 = vmatprep.subr.mxu0 0.0
    %270 = vmatpush2.msra.mxu0 0.0
    %271 = vmatprep.subr.mxu0 0.0
    %272 = vmatpush2.msra.mxu0 0.0
    %273 = vmatprep.subr.mxu0 0.0
    %274 = vmatpush2.msra.mxu0 0.0
    %275 = vmatprep.subr.mxu0 0.0
    %276 = vmatpush2.msra.mxu0 0.0
    %277 = vmatprep.mubr.f32.mxu0 0.0
    %278 = vmatmul.mubr.f32.gmra.mxu0 %v208
    %v279 = vpop.f32.mrf.mxu0
    %v280 = vadd.f32 %v199, %v279
    %v281 = vpop.f32.mrf.mxu0
    %v282 = vadd.f32 %v203, %v281
    %283 = vmatprep.mubr.f32.mxu0 0.0
    %284 = vmatmul.mubr.f32.gmra.mxu0 %v211
    %v285 = vpop.f32.mrf.mxu0
    %v286 = vadd.f32 %v199, %v285
    %v287 = vpop.f32.mrf.mxu0
    %v288 = vadd.f32 %v203, %v287
    %289 = vdwg.mxu0
    %v290 = vld [vmem:[#allocation6] sm:$0xff]
    %v291 = vld [vmem:[#allocation6 + $0x8] sm:$0xff]
    %v292 = vld [vmem:[#allocation6 + $0x10] sm:$0xff]
    %v293 = vld [vmem:[#allocation6 + $0x18] sm:$0xff]
    %v294 = vld [vmem:[#allocation6 + $0x20] sm:$0xff]
    %v295 = vld [vmem:[#allocation6 + $0x28] sm:$0xff]
    %v296 = vld [vmem:[#allocation6 + $0x30] sm:$0xff]
    %v297 = vld [vmem:[#allocation6 + $0x38] sm:$0xff]
    %v298 = vld [vmem:[#allocation6 + $0x40] sm:$0xff]
    %v299 = vld [vmem:[#allocation6 + $0x48] sm:$0xff]
    %v300 = vld [vmem:[#allocation6 + $0x50] sm:$0xff]
    %v301 = vld [vmem:[#allocation6 + $0x58] sm:$0xff]
    %v302 = vld [vmem:[#allocation6 + $0x60] sm:$0xff]
    %v303 = vld [vmem:[#allocation6 + $0x68] sm:$0xff]
    %v304 = vld [vmem:[#allocation6 + $0x70] sm:$0xff]
    %v305 = vld [vmem:[#allocation6 + $0x78] sm:$0xff]
    %v307 = vsel %vm206, 0.0, 0
    %309 = vmatprep.subr.mxu0 0.0
    %310 = vmatpush1.msra.mxu0 0.0
    %311 = vmatprep.subr.mxu0 0.0
    %312 = vmatpush1.msra.mxu0 0.0
    %313 = vmatprep.subr.mxu0 0.0
    %314 = vmatpush1.msra.mxu0 0.0
    %315 = vmatprep.subr.mxu0 0.0
    %316 = vmatpush1.msra.mxu0 0.0
    %317 = vmatprep.subr.mxu0 0.0
    %318 = vmatpush1.msra.mxu0 0.0
    %319 = vmatprep.subr.mxu0 0.0
    %320 = vmatpush1.msra.mxu0 0.0
    %321 = vmatprep.subr.mxu0 0.0
    %322 = vmatpush1.msra.mxu0 0.0
    %323 = vmatprep.subr.mxu0 0.0
    %324 = vmatpush1.msra.mxu0 0.0
    %325 = vmatprep.subr.mxu0 %v305
    %326 = vmatpush1.msra.mxu0 %v304
    %327 = vmatprep.subr.mxu0 %v303
    %328 = vmatpush1.msra.mxu0 %v302
    %329 = vmatprep.subr.mxu0 %v301
    %330 = vmatpush1.msra.mxu0 %v300
    %331 = vmatprep.subr.mxu0 %v299
    %332 = vmatpush1.msra.mxu0 %v298
    %333 = vmatprep.subr.mxu0 %v297
    %334 = vmatpush1.msra.mxu0 %v296
    %335 = vmatprep.subr.mxu0 %v295
    %336 = vmatpush1.msra.mxu0 %v294
    %337 = vmatprep.subr.mxu0 %v293
    %338 = vmatpush1.msra.mxu0 %v292
    %339 = vmatprep.subr.mxu0 %v291
    %340 = vmatpush1.msra.mxu0 %v290
    %341 = vmatprep.subr.mxu0 0.0
    %342 = vmatpush2.msra.mxu0 0.0
    %343 = vmatprep.subr.mxu0 0.0
    %344 = vmatpush2.msra.mxu0 0.0
    %345 = vmatprep.subr.mxu0 0.0
    %346 = vmatpush2.msra.mxu0 0.0
    %347 = vmatprep.subr.mxu0 0.0
    %348 = vmatpush2.msra.mxu0 0.0
    %349 = vmatprep.subr.mxu0 0.0
    %350 = vmatpush2.msra.mxu0 0.0
    %351 = vmatprep.subr.mxu0 0.0
    %352 = vmatpush2.msra.mxu0 0.0
    %353 = vmatprep.subr.mxu0 0.0
    %354 = vmatpush2.msra.mxu0 0.0
    %355 = vmatprep.subr.mxu0 0.0
    %356 = vmatpush2.msra.mxu0 0.0
    %357 = vmatprep.subr.mxu0 0.0
    %358 = vmatpush2.msra.mxu0 0.0
    %359 = vmatprep.subr.mxu0 0.0
    %360 = vmatpush2.msra.mxu0 0.0
    %361 = vmatprep.subr.mxu0 0.0
    %362 = vmatpush2.msra.mxu0 0.0
    %363 = vmatprep.subr.mxu0 0.0
    %364 = vmatpush2.msra.mxu0 0.0
    %365 = vmatprep.subr.mxu0 0.0
    %366 = vmatpush2.msra.mxu0 0.0
    %367 = vmatprep.subr.mxu0 0.0
    %368 = vmatpush2.msra.mxu0 0.0
    %369 = vmatprep.subr.mxu0 0.0
    %370 = vmatpush2.msra.mxu0 0.0
    %371 = vmatprep.subr.mxu0 0.0
    %372 = vmatpush2.msra.mxu0 0.0
    %373 = vmatprep.mubr.f32.mxu0 0.0
    %374 = vmatmul.mubr.f32.gmra.mxu0 %v307
    %v375 = vpop.f32.mrf.mxu0
    %v376 = vadd.f32 0.0, %v375
    %v377 = vpop.f32.mrf.mxu0
    %v378 = vadd.f32 0.0, %v377
    %379 = vdwg.mxu0
    %v380 = vadd.f32 %v280, %v376
    %v381 = vadd.f32 %v282, %v378
    %v382 = vxor.u32 %v380, 2147483648
    %v383 = vxor.u32 %v381, 2147483648
    %v384 = vmul.f32 %v382, 1.442695
    %v385 = vpow.pop %v384
    %v386 = vmul.f32 %v383, 1.442695
    %v387 = vpow.pop %v386
    %v388 = vadd.f32 %v385, 1.0
    %v389 = vadd.f32 %v387, 1.0
    %v390 = vrcp.pop %v388
    %v391 = vmul.f32 1.0, %v390
    %v392 = vrcp.pop %v389
    %v393 = vmul.f32 1.0, %v392
    %v394 = vtanh.pop %v381
    %v395 = vmul.f32 %v391, 0.0
    %v396 = vmul.f32 %v391, %v394
    %398 = vrot.lane.b32.xlu0 %v396, 64
    %v399 = vpop.permute.xlu0 %398
    %v401 = vadd.f32 %v395, %v399
    %v402 = vtanh.pop %v401
    %v403 = vmul.f32 %v393, %v402
    %405 = vrot.lane.b32.xlu0 %v403, 64
    %v406 = vpop.permute.xlu0 %405
    %v407 = vsel %vm206, %v406, 0
    %409 = vmatprep.subr.mxu0 0.0
    %410 = vmatpush1.msra.mxu0 0.0
    %411 = vmatprep.subr.mxu0 0.0
    %412 = vmatpush1.msra.mxu0 0.0
    %413 = vmatprep.subr.mxu0 0.0
    %414 = vmatpush1.msra.mxu0 0.0
    %415 = vmatprep.subr.mxu0 0.0
    %416 = vmatpush1.msra.mxu0 0.0
    %417 = vmatprep.subr.mxu0 0.0
    %418 = vmatpush1.msra.mxu0 0.0
    %419 = vmatprep.subr.mxu0 0.0
    %420 = vmatpush1.msra.mxu0 0.0
    %421 = vmatprep.subr.mxu0 0.0
    %422 = vmatpush1.msra.mxu0 0.0
    %423 = vmatprep.subr.mxu0 0.0
    %424 = vmatpush1.msra.mxu0 0.0
    %425 = vmatprep.subr.mxu0 %v305
    %426 = vmatpush1.msra.mxu0 %v304
    %427 = vmatprep.subr.mxu0 %v303
    %428 = vmatpush1.msra.mxu0 %v302
    %429 = vmatprep.subr.mxu0 %v301
    %430 = vmatpush1.msra.mxu0 %v300
    %431 = vmatprep.subr.mxu0 %v299
    %432 = vmatpush1.msra.mxu0 %v298
    %433 = vmatprep.subr.mxu0 %v297
    %434 = vmatpush1.msra.mxu0 %v296
    %435 = vmatprep.subr.mxu0 %v295
    %436 = vmatpush1.msra.mxu0 %v294
    %437 = vmatprep.subr.mxu0 %v293
    %438 = vmatpush1.msra.mxu0 %v292
    %439 = vmatprep.subr.mxu0 %v291
    %440 = vmatpush1.msra.mxu0 %v290
    %441 = vmatprep.subr.mxu0 0.0
    %442 = vmatpush2.msra.mxu0 0.0
    %443 = vmatprep.subr.mxu0 0.0
    %444 = vmatpush2.msra.mxu0 0.0
    %445 = vmatprep.subr.mxu0 0.0
    %446 = vmatpush2.msra.mxu0 0.0
    %447 = vmatprep.subr.mxu0 0.0
    %448 = vmatpush2.msra.mxu0 0.0
    %449 = vmatprep.subr.mxu0 0.0
    %450 = vmatpush2.msra.mxu0 0.0
    %451 = vmatprep.subr.mxu0 0.0
    %452 = vmatpush2.msra.mxu0 0.0
    %453 = vmatprep.subr.mxu0 0.0
    %454 = vmatpush2.msra.mxu0 0.0
    %455 = vmatprep.subr.mxu0 0.0
    %456 = vmatpush2.msra.mxu0 0.0
    %457 = vmatprep.subr.mxu0 0.0
    %458 = vmatpush2.msra.mxu0 0.0
    %459 = vmatprep.subr.mxu0 0.0
    %460 = vmatpush2.msra.mxu0 0.0
    %461 = vmatprep.subr.mxu0 0.0
    %462 = vmatpush2.msra.mxu0 0.0
    %463 = vmatprep.subr.mxu0 0.0
    %464 = vmatpush2.msra.mxu0 0.0
    %465 = vmatprep.subr.mxu0 0.0
    %466 = vmatpush2.msra.mxu0 0.0
    %467 = vmatprep.subr.mxu0 0.0
    %468 = vmatpush2.msra.mxu0 0.0
    %469 = vmatprep.subr.mxu0 0.0
    %470 = vmatpush2.msra.mxu0 0.0
    %471 = vmatprep.subr.mxu0 0.0
    %472 = vmatpush2.msra.mxu0 0.0
    %473 = vmatprep.mubr.f32.mxu0 0.0
    %474 = vmatmul.mubr.f32.gmra.mxu0 %v407
    %v475 = vpop.f32.mrf.mxu0
    %v476 = vadd.f32 0.0, %v475
    %v477 = vpop.f32.mrf.mxu0
    %v478 = vadd.f32 0.0, %v477
    %479 = vdwg.mxu0
    %v482 = vrot.slane %v476, 6
    %v483 = vrot.slane %v478, 6
    %v486 = vadd.f32 %v280, %v482
    %v487 = vadd.f32 %v282, %v483
    %v488 = vxor.u32 %v486, 2147483648
    %v489 = vxor.u32 %v487, 2147483648
    %v490 = vmul.f32 %v488, 1.442695
    %v491 = vpow.pop %v490
    %v492 = vmul.f32 %v489, 1.442695
    %v493 = vpow.pop %v492
    %v494 = vadd.f32 %v491, 1.0
    %v495 = vadd.f32 %v493, 1.0
    %v496 = vrcp.pop %v494
    %v497 = vmul.f32 1.0, %v496
    %v498 = vrcp.pop %v495
    %v499 = vmul.f32 1.0, %v498
    %v500 = vtanh.pop %v487
    %v502 = vrot.slane %v401, 6
    %v504 = vmul.f32 %v497, %v502
    %v505 = vmul.f32 %v497, %v500
    %507 = vrot.lane.b32.xlu0 %v505, 64
    %v508 = vpop.permute.xlu0 %507
    %v510 = vadd.f32 %v504, %v508
    %v511 = vtanh.pop %v510
    %v512 = vmul.f32 %v499, %v511
    %v514 = vrot.slane %v512, 2
    %515 = vrot.lane.b32.xlu0 %v514, 64
    %v516 = vpop.permute.xlu0 %515
    %v517 = vsel %vm206, %v516, 0
    %519 = vmatprep.subr.mxu0 0.0
    %520 = vmatpush1.msra.mxu0 0.0
    %521 = vmatprep.subr.mxu0 0.0
    %522 = vmatpush1.msra.mxu0 0.0
    %523 = vmatprep.subr.mxu0 0.0
    %524 = vmatpush1.msra.mxu0 0.0
    %525 = vmatprep.subr.mxu0 0.0
    %526 = vmatpush1.msra.mxu0 0.0
    %527 = vmatprep.subr.mxu0 0.0
    %528 = vmatpush1.msra.mxu0 0.0
    %529 = vmatprep.subr.mxu0 0.0
    %530 = vmatpush1.msra.mxu0 0.0
    %531 = vmatprep.subr.mxu0 0.0
    %532 = vmatpush1.msra.mxu0 0.0
    %533 = vmatprep.subr.mxu0 0.0
    %534 = vmatpush1.msra.mxu0 0.0
    %535 = vmatprep.subr.mxu0 %v305
    %536 = vmatpush1.msra.mxu0 %v304
    %537 = vmatprep.subr.mxu0 %v303
    %538 = vmatpush1.msra.mxu0 %v302
    %539 = vmatprep.subr.mxu0 %v301
    %540 = vmatpush1.msra.mxu0 %v300
    %541 = vmatprep.subr.mxu0 %v299
    %542 = vmatpush1.msra.mxu0 %v298
    %543 = vmatprep.subr.mxu0 %v297
    %544 = vmatpush1.msra.mxu0 %v296
    %545 = vmatprep.subr.mxu0 %v295
    %546 = vmatpush1.msra.mxu0 %v294
    %547 = vmatprep.subr.mxu0 %v293
    %548 = vmatpush1.msra.mxu0 %v292
    %549 = vmatprep.subr.mxu0 %v291
    %550 = vmatpush1.msra.mxu0 %v290
    %551 = vmatprep.subr.mxu0 0.0
    %552 = vmatpush2.msra.mxu0 0.0
    %553 = vmatprep.subr.mxu0 0.0
    %554 = vmatpush2.msra.mxu0 0.0
    %555 = vmatprep.subr.mxu0 0.0
    %556 = vmatpush2.msra.mxu0 0.0
    %557 = vmatprep.subr.mxu0 0.0
    %558 = vmatpush2.msra.mxu0 0.0
    %559 = vmatprep.subr.mxu0 0.0
    %560 = vmatpush2.msra.mxu0 0.0
    %561 = vmatprep.subr.mxu0 0.0
    %562 = vmatpush2.msra.mxu0 0.0
    %563 = vmatprep.subr.mxu0 0.0
    %564 = vmatpush2.msra.mxu0 0.0
    %565 = vmatprep.subr.mxu0 0.0
    %566 = vmatpush2.msra.mxu0 0.0
    %567 = vmatprep.subr.mxu0 0.0
    %568 = vmatpush2.msra.mxu0 0.0
    %569 = vmatprep.subr.mxu0 0.0
    %570 = vmatpush2.msra.mxu0 0.0
    %571 = vmatprep.subr.mxu0 0.0
    %572 = vmatpush2.msra.mxu0 0.0
    %573 = vmatprep.subr.mxu0 0.0
    %574 = vmatpush2.msra.mxu0 0.0
    %575 = vmatprep.subr.mxu0 0.0
    %576 = vmatpush2.msra.mxu0 0.0
    %577 = vmatprep.subr.mxu0 0.0
    %578 = vmatpush2.msra.mxu0 0.0
    %579 = vmatprep.subr.mxu0 0.0
    %580 = vmatpush2.msra.mxu0 0.0
    %581 = vmatprep.subr.mxu0 0.0
    %582 = vmatpush2.msra.mxu0 0.0
    %583 = vmatprep.mubr.f32.mxu0 0.0
    %584 = vmatmul.mubr.f32.gmra.mxu0 %v517
    %v585 = vpop.f32.mrf.mxu0
    %v586 = vadd.f32 0.0, %v585
    %v587 = vpop.f32.mrf.mxu0
    %v588 = vadd.f32 0.0, %v587
    %589 = vdwg.mxu0
    %v592 = vrot.slane %v586, 4
    %v593 = vrot.slane %v588, 4
    %v596 = vadd.f32 %v280, %v592
    %v597 = vadd.f32 %v282, %v593
    %v598 = vxor.u32 %v596, 2147483648
    %v599 = vxor.u32 %v597, 2147483648
    %v600 = vmul.f32 %v598, 1.442695
    %v601 = vpow.pop %v600
    %v602 = vmul.f32 %v599, 1.442695
    %v603 = vpow.pop %v602
    %v604 = vadd.f32 %v601, 1.0
    %v605 = vadd.f32 %v603, 1.0
    %v606 = vrcp.pop %v604
    %v607 = vmul.f32 1.0, %v606
    %v608 = vrcp.pop %v605
    %v609 = vmul.f32 1.0, %v608
    %v610 = vtanh.pop %v597
    %v612 = vrot.slane %v510, 6
    %v614 = vmul.f32 %v607, %v612
    %v615 = vmul.f32 %v607, %v610
    %617 = vrot.lane.b32.xlu0 %v615, 64
    %v618 = vpop.permute.xlu0 %617
    %v620 = vadd.f32 %v614, %v618
    %v621 = vtanh.pop %v620
    %v622 = vmul.f32 %v609, %v621
    %v624 = vrot.slane %v622, 4
    %625 = vrot.lane.b32.xlu0 %v624, 64
    %v626 = vpop.permute.xlu0 %625
    %v627 = vsel %vm206, %v626, 0
    %629 = vmatprep.subr.mxu0 0.0
    %630 = vmatpush1.msra.mxu0 0.0
    %631 = vmatprep.subr.mxu0 0.0
    %632 = vmatpush1.msra.mxu0 0.0
    %633 = vmatprep.subr.mxu0 0.0
    %634 = vmatpush1.msra.mxu0 0.0
    %635 = vmatprep.subr.mxu0 0.0
    %636 = vmatpush1.msra.mxu0 0.0
    %637 = vmatprep.subr.mxu0 0.0
    %638 = vmatpush1.msra.mxu0 0.0
    %639 = vmatprep.subr.mxu0 0.0
    %640 = vmatpush1.msra.mxu0 0.0
    %641 = vmatprep.subr.mxu0 0.0
    %642 = vmatpush1.msra.mxu0 0.0
    %643 = vmatprep.subr.mxu0 0.0
    %644 = vmatpush1.msra.mxu0 0.0
    %645 = vmatprep.subr.mxu0 %v305
    %646 = vmatpush1.msra.mxu0 %v304
    %647 = vmatprep.subr.mxu0 %v303
    %648 = vmatpush1.msra.mxu0 %v302
    %649 = vmatprep.subr.mxu0 %v301
    %650 = vmatpush1.msra.mxu0 %v300
    %651 = vmatprep.subr.mxu0 %v299
    %652 = vmatpush1.msra.mxu0 %v298
    %653 = vmatprep.subr.mxu0 %v297
    %654 = vmatpush1.msra.mxu0 %v296
    %655 = vmatprep.subr.mxu0 %v295
    %656 = vmatpush1.msra.mxu0 %v294
    %657 = vmatprep.subr.mxu0 %v293
    %658 = vmatpush1.msra.mxu0 %v292
    %659 = vmatprep.subr.mxu0 %v291
    %660 = vmatpush1.msra.mxu0 %v290
    %661 = vmatprep.subr.mxu0 0.0
    %662 = vmatpush2.msra.mxu0 0.0
    %663 = vmatprep.subr.mxu0 0.0
    %664 = vmatpush2.msra.mxu0 0.0
    %665 = vmatprep.subr.mxu0 0.0
    %666 = vmatpush2.msra.mxu0 0.0
    %667 = vmatprep.subr.mxu0 0.0
    %668 = vmatpush2.msra.mxu0 0.0
    %669 = vmatprep.subr.mxu0 0.0
    %670 = vmatpush2.msra.mxu0 0.0
    %671 = vmatprep.subr.mxu0 0.0
    %672 = vmatpush2.msra.mxu0 0.0
    %673 = vmatprep.subr.mxu0 0.0
    %674 = vmatpush2.msra.mxu0 0.0
    %675 = vmatprep.subr.mxu0 0.0
    %676 = vmatpush2.msra.mxu0 0.0
    %677 = vmatprep.subr.mxu0 0.0
    %678 = vmatpush2.msra.mxu0 0.0
    %679 = vmatprep.subr.mxu0 0.0
    %680 = vmatpush2.msra.mxu0 0.0
    %681 = vmatprep.subr.mxu0 0.0
    %682 = vmatpush2.msra.mxu0 0.0
    %683 = vmatprep.subr.mxu0 0.0
    %684 = vmatpush2.msra.mxu0 0.0
    %685 = vmatprep.subr.mxu0 0.0
    %686 = vmatpush2.msra.mxu0 0.0
    %687 = vmatprep.subr.mxu0 0.0
    %688 = vmatpush2.msra.mxu0 0.0
    %689 = vmatprep.subr.mxu0 0.0
    %690 = vmatpush2.msra.mxu0 0.0
    %691 = vmatprep.subr.mxu0 0.0
    %692 = vmatpush2.msra.mxu0 0.0
    %693 = vmatprep.mubr.f32.mxu0 0.0
    %694 = vmatmul.mubr.f32.gmra.mxu0 %v627
    %v695 = vpop.f32.mrf.mxu0
    %v696 = vadd.f32 0.0, %v695
    %v697 = vpop.f32.mrf.mxu0
    %v698 = vadd.f32 0.0, %v697
    %699 = vdwg.mxu0
    %v702 = vrot.slane %v696, 2
    %v703 = vrot.slane %v698, 2
    %v706 = vadd.f32 %v280, %v702
    %v707 = vadd.f32 %v282, %v703
    %v708 = vxor.u32 %v706, 2147483648
    %v709 = vxor.u32 %v707, 2147483648
    %v710 = vmul.f32 %v708, 1.442695
    %v711 = vpow.pop %v710
    %v712 = vmul.f32 %v709, 1.442695
    %v713 = vpow.pop %v712
    %v714 = vadd.f32 %v711, 1.0
    %v715 = vadd.f32 %v713, 1.0
    %v716 = vrcp.pop %v714
    %v717 = vmul.f32 1.0, %v716
    %v718 = vrcp.pop %v715
    %v719 = vmul.f32 1.0, %v718
    %v720 = vtanh.pop %v707
    %v722 = vrot.slane %v620, 6
    %v724 = vmul.f32 %v717, %v722
    %v725 = vmul.f32 %v717, %v720
    %727 = vrot.lane.b32.xlu0 %v725, 64
    %v728 = vpop.permute.xlu0 %727
    %v730 = vadd.f32 %v724, %v728
    %v731 = vtanh.pop %v730
    %v732 = vmul.f32 %v719, %v731
    %v734 = vrot.slane %v732, 6
    %735 = vrot.lane.b32.xlu0 %v734, 64
    %v736 = vpop.permute.xlu0 %735
    %v737 = vsel %vm206, %v736, 0
    %739 = vmatprep.subr.mxu0 0.0
    %740 = vmatpush1.msra.mxu0 0.0
    %741 = vmatprep.subr.mxu0 0.0
    %742 = vmatpush1.msra.mxu0 0.0
    %743 = vmatprep.subr.mxu0 0.0
    %744 = vmatpush1.msra.mxu0 0.0
    %745 = vmatprep.subr.mxu0 0.0
    %746 = vmatpush1.msra.mxu0 0.0
    %747 = vmatprep.subr.mxu0 0.0
    %748 = vmatpush1.msra.mxu0 0.0
    %749 = vmatprep.subr.mxu0 0.0
    %750 = vmatpush1.msra.mxu0 0.0
    %751 = vmatprep.subr.mxu0 0.0
    %752 = vmatpush1.msra.mxu0 0.0
    %753 = vmatprep.subr.mxu0 0.0
    %754 = vmatpush1.msra.mxu0 0.0
    %755 = vmatprep.subr.mxu0 %v305
    %756 = vmatpush1.msra.mxu0 %v304
    %757 = vmatprep.subr.mxu0 %v303
    %758 = vmatpush1.msra.mxu0 %v302
    %759 = vmatprep.subr.mxu0 %v301
    %760 = vmatpush1.msra.mxu0 %v300
    %761 = vmatprep.subr.mxu0 %v299
    %762 = vmatpush1.msra.mxu0 %v298
    %763 = vmatprep.subr.mxu0 %v297
    %764 = vmatpush1.msra.mxu0 %v296
    %765 = vmatprep.subr.mxu0 %v295
    %766 = vmatpush1.msra.mxu0 %v294
    %767 = vmatprep.subr.mxu0 %v293
    %768 = vmatpush1.msra.mxu0 %v292
    %769 = vmatprep.subr.mxu0 %v291
    %770 = vmatpush1.msra.mxu0 %v290
    %771 = vmatprep.subr.mxu0 0.0
    %772 = vmatpush2.msra.mxu0 0.0
    %773 = vmatprep.subr.mxu0 0.0
    %774 = vmatpush2.msra.mxu0 0.0
    %775 = vmatprep.subr.mxu0 0.0
    %776 = vmatpush2.msra.mxu0 0.0
    %777 = vmatprep.subr.mxu0 0.0
    %778 = vmatpush2.msra.mxu0 0.0
    %779 = vmatprep.subr.mxu0 0.0
    %780 = vmatpush2.msra.mxu0 0.0
    %781 = vmatprep.subr.mxu0 0.0
    %782 = vmatpush2.msra.mxu0 0.0
    %783 = vmatprep.subr.mxu0 0.0
    %784 = vmatpush2.msra.mxu0 0.0
    %785 = vmatprep.subr.mxu0 0.0
    %786 = vmatpush2.msra.mxu0 0.0
    %787 = vmatprep.subr.mxu0 0.0
    %788 = vmatpush2.msra.mxu0 0.0
    %789 = vmatprep.subr.mxu0 0.0
    %790 = vmatpush2.msra.mxu0 0.0
    %791 = vmatprep.subr.mxu0 0.0
    %792 = vmatpush2.msra.mxu0 0.0
    %793 = vmatprep.subr.mxu0 0.0
    %794 = vmatpush2.msra.mxu0 0.0
    %795 = vmatprep.subr.mxu0 0.0
    %796 = vmatpush2.msra.mxu0 0.0
    %797 = vmatprep.subr.mxu0 0.0
    %798 = vmatpush2.msra.mxu0 0.0
    %799 = vmatprep.subr.mxu0 0.0
    %800 = vmatpush2.msra.mxu0 0.0
    %801 = vmatprep.subr.mxu0 0.0
    %802 = vmatpush2.msra.mxu0 0.0
    %803 = vmatprep.mubr.f32.mxu0 0.0
    %804 = vmatmul.mubr.f32.gmra.mxu0 %v737
    %v805 = vpop.f32.mrf.mxu0
    %v806 = vadd.f32 0.0, %v805
    %v807 = vpop.f32.mrf.mxu0
    %v808 = vadd.f32 0.0, %v807
    %809 = vdwg.mxu0
    %v810 = vadd.f32 %v286, %v806
    %v811 = vadd.f32 %v288, %v808
    %v812 = vxor.u32 %v810, 2147483648
    %v813 = vxor.u32 %v811, 2147483648
    %v814 = vmul.f32 %v812, 1.442695
    %v815 = vpow.pop %v814
    %v816 = vmul.f32 %v813, 1.442695
    %v817 = vpow.pop %v816
    %v818 = vadd.f32 %v815, 1.0
    %v819 = vadd.f32 %v817, 1.0
    %v820 = vrcp.pop %v818
    %v821 = vmul.f32 1.0, %v820
    %v822 = vrcp.pop %v819
    %v823 = vmul.f32 1.0, %v822
    %v824 = vtanh.pop %v811
    %v826 = vrot.slane %v730, 6
    %v828 = vmul.f32 %v821, %v826
    %v829 = vmul.f32 %v821, %v824
    %831 = vrot.lane.b32.xlu0 %v829, 64
    %v832 = vpop.permute.xlu0 %831
    %v834 = vadd.f32 %v828, %v832
    %v835 = vtanh.pop %v834
    %v836 = vmul.f32 %v823, %v835
    %838 = vrot.lane.b32.xlu0 %v836, 64
    %v839 = vpop.permute.xlu0 %838
    %v840 = vsel %vm206, %v839, 0
    %842 = vmatprep.subr.mxu0 0.0
    %843 = vmatpush1.msra.mxu0 0.0
    %844 = vmatprep.subr.mxu0 0.0
    %845 = vmatpush1.msra.mxu0 0.0
    %846 = vmatprep.subr.mxu0 0.0
    %847 = vmatpush1.msra.mxu0 0.0
    %848 = vmatprep.subr.mxu0 0.0
    %849 = vmatpush1.msra.mxu0 0.0
    %850 = vmatprep.subr.mxu0 0.0
    %851 = vmatpush1.msra.mxu0 0.0
    %852 = vmatprep.subr.mxu0 0.0
    %853 = vmatpush1.msra.mxu0 0.0
    %854 = vmatprep.subr.mxu0 0.0
    %855 = vmatpush1.msra.mxu0 0.0
    %856 = vmatprep.subr.mxu0 0.0
    %857 = vmatpush1.msra.mxu0 0.0
    %858 = vmatprep.subr.mxu0 %v305
    %859 = vmatpush1.msra.mxu0 %v304
    %860 = vmatprep.subr.mxu0 %v303
    %861 = vmatpush1.msra.mxu0 %v302
    %862 = vmatprep.subr.mxu0 %v301
    %863 = vmatpush1.msra.mxu0 %v300
    %864 = vmatprep.subr.mxu0 %v299
    %865 = vmatpush1.msra.mxu0 %v298
    %866 = vmatprep.subr.mxu0 %v297
    %867 = vmatpush1.msra.mxu0 %v296
    %868 = vmatprep.subr.mxu0 %v295
    %869 = vmatpush1.msra.mxu0 %v294
    %870 = vmatprep.subr.mxu0 %v293
    %871 = vmatpush1.msra.mxu0 %v292
    %872 = vmatprep.subr.mxu0 %v291
    %873 = vmatpush1.msra.mxu0 %v290
    %874 = vmatprep.subr.mxu0 0.0
    %875 = vmatpush2.msra.mxu0 0.0
    %876 = vmatprep.subr.mxu0 0.0
    %877 = vmatpush2.msra.mxu0 0.0
    %878 = vmatprep.subr.mxu0 0.0
    %879 = vmatpush2.msra.mxu0 0.0
    %880 = vmatprep.subr.mxu0 0.0
    %881 = vmatpush2.msra.mxu0 0.0
    %882 = vmatprep.subr.mxu0 0.0
    %883 = vmatpush2.msra.mxu0 0.0
    %884 = vmatprep.subr.mxu0 0.0
    %885 = vmatpush2.msra.mxu0 0.0
    %886 = vmatprep.subr.mxu0 0.0
    %887 = vmatpush2.msra.mxu0 0.0
    %888 = vmatprep.subr.mxu0 0.0
    %889 = vmatpush2.msra.mxu0 0.0
    %890 = vmatprep.subr.mxu0 0.0
    %891 = vmatpush2.msra.mxu0 0.0
    %892 = vmatprep.subr.mxu0 0.0
    %893 = vmatpush2.msra.mxu0 0.0
    %894 = vmatprep.subr.mxu0 0.0
    %895 = vmatpush2.msra.mxu0 0.0
    %896 = vmatprep.subr.mxu0 0.0
    %897 = vmatpush2.msra.mxu0 0.0
    %898 = vmatprep.subr.mxu0 0.0
    %899 = vmatpush2.msra.mxu0 0.0
    %900 = vmatprep.subr.mxu0 0.0
    %901 = vmatpush2.msra.mxu0 0.0
    %902 = vmatprep.subr.mxu0 0.0
    %903 = vmatpush2.msra.mxu0 0.0
    %904 = vmatprep.subr.mxu0 0.0
    %905 = vmatpush2.msra.mxu0 0.0
    %906 = vmatprep.mubr.f32.mxu0 0.0
    %907 = vmatmul.mubr.f32.gmra.mxu0 %v840
    %v908 = vpop.f32.mrf.mxu0
    %v909 = vadd.f32 0.0, %v908
    %v910 = vpop.f32.mrf.mxu0
    %v911 = vadd.f32 0.0, %v910
    %912 = vdwg.mxu0
    %v915 = vrot.slane %v909, 6
    %v916 = vrot.slane %v911, 6
    %v919 = vadd.f32 %v286, %v915
    %v920 = vadd.f32 %v288, %v916
    %v921 = vxor.u32 %v919, 2147483648
    %v922 = vxor.u32 %v920, 2147483648
    %v923 = vmul.f32 %v921, 1.442695
    %v924 = vpow.pop %v923
    %v925 = vmul.f32 %v922, 1.442695
    %v926 = vpow.pop %v925
    %v927 = vadd.f32 %v924, 1.0
    %v928 = vadd.f32 %v926, 1.0
    %v929 = vrcp.pop %v927
    %v930 = vmul.f32 1.0, %v929
    %v931 = vrcp.pop %v928
    %v932 = vmul.f32 1.0, %v931
    %v933 = vtanh.pop %v920
    %v935 = vrot.slane %v834, 6
    %v937 = vmul.f32 %v930, %v935
    %v938 = vmul.f32 %v930, %v933
    %940 = vrot.lane.b32.xlu0 %v938, 64
    %v941 = vpop.permute.xlu0 %940
    %v943 = vadd.f32 %v937, %v941
    %v944 = vtanh.pop %v943
    %v945 = vmul.f32 %v932, %v944
    %v947 = vrot.slane %v945, 2
    %948 = vrot.lane.b32.xlu0 %v947, 64
    %v949 = vpop.permute.xlu0 %948
    %v950 = vsel %vm206, %v949, 0
    %952 = vmatprep.subr.mxu0 0.0
    %953 = vmatpush1.msra.mxu0 0.0
    %954 = vmatprep.subr.mxu0 0.0
    %955 = vmatpush1.msra.mxu0 0.0
    %956 = vmatprep.subr.mxu0 0.0
    %957 = vmatpush1.msra.mxu0 0.0
    %958 = vmatprep.subr.mxu0 0.0
    %959 = vmatpush1.msra.mxu0 0.0
    %960 = vmatprep.subr.mxu0 0.0
    %961 = vmatpush1.msra.mxu0 0.0
    %962 = vmatprep.subr.mxu0 0.0
    %963 = vmatpush1.msra.mxu0 0.0
    %964 = vmatprep.subr.mxu0 0.0
    %965 = vmatpush1.msra.mxu0 0.0
    %966 = vmatprep.subr.mxu0 0.0
    %967 = vmatpush1.msra.mxu0 0.0
    %968 = vmatprep.subr.mxu0 %v305
    %969 = vmatpush1.msra.mxu0 %v304
    %970 = vmatprep.subr.mxu0 %v303
    %971 = vmatpush1.msra.mxu0 %v302
    %972 = vmatprep.subr.mxu0 %v301
    %973 = vmatpush1.msra.mxu0 %v300
    %974 = vmatprep.subr.mxu0 %v299
    %975 = vmatpush1.msra.mxu0 %v298
    %976 = vmatprep.subr.mxu0 %v297
    %977 = vmatpush1.msra.mxu0 %v296
    %978 = vmatprep.subr.mxu0 %v295
    %979 = vmatpush1.msra.mxu0 %v294
    %980 = vmatprep.subr.mxu0 %v293
    %981 = vmatpush1.msra.mxu0 %v292
    %982 = vmatprep.subr.mxu0 %v291
    %983 = vmatpush1.msra.mxu0 %v290
    %984 = vmatprep.subr.mxu0 0.0
    %985 = vmatpush2.msra.mxu0 0.0
    %986 = vmatprep.subr.mxu0 0.0
    %987 = vmatpush2.msra.mxu0 0.0
    %988 = vmatprep.subr.mxu0 0.0
    %989 = vmatpush2.msra.mxu0 0.0
    %990 = vmatprep.subr.mxu0 0.0
    %991 = vmatpush2.msra.mxu0 0.0
    %992 = vmatprep.subr.mxu0 0.0
    %993 = vmatpush2.msra.mxu0 0.0
    %994 = vmatprep.subr.mxu0 0.0
    %995 = vmatpush2.msra.mxu0 0.0
    %996 = vmatprep.subr.mxu0 0.0
    %997 = vmatpush2.msra.mxu0 0.0
    %998 = vmatprep.subr.mxu0 0.0
    %999 = vmatpush2.msra.mxu0 0.0
    %1000 = vmatprep.subr.mxu0 0.0
    %1001 = vmatpush2.msra.mxu0 0.0
    %1002 = vmatprep.subr.mxu0 0.0
    %1003 = vmatpush2.msra.mxu0 0.0
    %1004 = vmatprep.subr.mxu0 0.0
    %1005 = vmatpush2.msra.mxu0 0.0
    %1006 = vmatprep.subr.mxu0 0.0
    %1007 = vmatpush2.msra.mxu0 0.0
    %1008 = vmatprep.subr.mxu0 0.0
    %1009 = vmatpush2.msra.mxu0 0.0
    %1010 = vmatprep.subr.mxu0 0.0
    %1011 = vmatpush2.msra.mxu0 0.0
    %1012 = vmatprep.subr.mxu0 0.0
    %1013 = vmatpush2.msra.mxu0 0.0
    %1014 = vmatprep.subr.mxu0 0.0
    %1015 = vmatpush2.msra.mxu0 0.0
    %1016 = vmatprep.mubr.f32.mxu0 0.0
    %1017 = vmatmul.mubr.f32.gmra.mxu0 %v950
    %v1018 = vpop.f32.mrf.mxu0
    %v1019 = vadd.f32 0.0, %v1018
    %v1020 = vpop.f32.mrf.mxu0
    %v1021 = vadd.f32 0.0, %v1020
    %1022 = vdwg.mxu0
    %v1025 = vrot.slane %v1019, 4
    %v1026 = vrot.slane %v1021, 4
    %v1029 = vadd.f32 %v286, %v1025
    %v1030 = vadd.f32 %v288, %v1026
    %v1031 = vxor.u32 %v1029, 2147483648
    %v1032 = vxor.u32 %v1030, 2147483648
    %v1033 = vmul.f32 %v1031, 1.442695
    %v1034 = vpow.pop %v1033
    %v1035 = vmul.f32 %v1032, 1.442695
    %v1036 = vpow.pop %v1035
    %v1037 = vadd.f32 %v1034, 1.0
    %v1038 = vadd.f32 %v1036, 1.0
    %v1039 = vrcp.pop %v1037
    %v1040 = vmul.f32 1.0, %v1039
    %v1041 = vrcp.pop %v1038
    %v1042 = vmul.f32 1.0, %v1041
    %v1043 = vtanh.pop %v1030
    %v1045 = vrot.slane %v943, 6
    %v1047 = vmul.f32 %v1040, %v1045
    %v1048 = vmul.f32 %v1040, %v1043
    %1050 = vrot.lane.b32.xlu0 %v1048, 64
    %v1051 = vpop.permute.xlu0 %1050
    %v1053 = vadd.f32 %v1047, %v1051
    %v1054 = vtanh.pop %v1053
    %v1055 = vmul.f32 %v1042, %v1054
    %v1057 = vrot.slane %v1055, 4
    %1058 = vrot.lane.b32.xlu0 %v1057, 64
    %v1059 = vpop.permute.xlu0 %1058
    %v1060 = vsel %vm206, %v1059, 0
    %1062 = vmatprep.subr.mxu0 0.0
    %1063 = vmatpush1.msra.mxu0 0.0
    %1064 = vmatprep.subr.mxu0 0.0
    %1065 = vmatpush1.msra.mxu0 0.0
    %1066 = vmatprep.subr.mxu0 0.0
    %1067 = vmatpush1.msra.mxu0 0.0
    %1068 = vmatprep.subr.mxu0 0.0
    %1069 = vmatpush1.msra.mxu0 0.0
    %1070 = vmatprep.subr.mxu0 0.0
    %1071 = vmatpush1.msra.mxu0 0.0
    %1072 = vmatprep.subr.mxu0 0.0
    %1073 = vmatpush1.msra.mxu0 0.0
    %1074 = vmatprep.subr.mxu0 0.0
    %1075 = vmatpush1.msra.mxu0 0.0
    %1076 = vmatprep.subr.mxu0 0.0
    %1077 = vmatpush1.msra.mxu0 0.0
    %1078 = vmatprep.subr.mxu0 %v305
    %1079 = vmatpush1.msra.mxu0 %v304
    %1080 = vmatprep.subr.mxu0 %v303
    %1081 = vmatpush1.msra.mxu0 %v302
    %1082 = vmatprep.subr.mxu0 %v301
    %1083 = vmatpush1.msra.mxu0 %v300
    %1084 = vmatprep.subr.mxu0 %v299
    %1085 = vmatpush1.msra.mxu0 %v298
    %1086 = vmatprep.subr.mxu0 %v297
    %1087 = vmatpush1.msra.mxu0 %v296
    %1088 = vmatprep.subr.mxu0 %v295
    %1089 = vmatpush1.msra.mxu0 %v294
    %1090 = vmatprep.subr.mxu0 %v293
    %1091 = vmatpush1.msra.mxu0 %v292
    %1092 = vmatprep.subr.mxu0 %v291
    %1093 = vmatpush1.msra.mxu0 %v290
    %1094 = vmatprep.subr.mxu0 0.0
    %1095 = vmatpush2.msra.mxu0 0.0
    %1096 = vmatprep.subr.mxu0 0.0
    %1097 = vmatpush2.msra.mxu0 0.0
    %1098 = vmatprep.subr.mxu0 0.0
    %1099 = vmatpush2.msra.mxu0 0.0
    %1100 = vmatprep.subr.mxu0 0.0
    %1101 = vmatpush2.msra.mxu0 0.0
    %1102 = vmatprep.subr.mxu0 0.0
    %1103 = vmatpush2.msra.mxu0 0.0
    %1104 = vmatprep.subr.mxu0 0.0
    %1105 = vmatpush2.msra.mxu0 0.0
    %1106 = vmatprep.subr.mxu0 0.0
    %1107 = vmatpush2.msra.mxu0 0.0
    %1108 = vmatprep.subr.mxu0 0.0
    %1109 = vmatpush2.msra.mxu0 0.0
    %1110 = vmatprep.subr.mxu0 0.0
    %1111 = vmatpush2.msra.mxu0 0.0
    %1112 = vmatprep.subr.mxu0 0.0
    %1113 = vmatpush2.msra.mxu0 0.0
    %1114 = vmatprep.subr.mxu0 0.0
    %1115 = vmatpush2.msra.mxu0 0.0
    %1116 = vmatprep.subr.mxu0 0.0
    %1117 = vmatpush2.msra.mxu0 0.0
    %1118 = vmatprep.subr.mxu0 0.0
    %1119 = vmatpush2.msra.mxu0 0.0
    %1120 = vmatprep.subr.mxu0 0.0
    %1121 = vmatpush2.msra.mxu0 0.0
    %1122 = vmatprep.subr.mxu0 0.0
    %1123 = vmatpush2.msra.mxu0 0.0
    %1124 = vmatprep.subr.mxu0 0.0
    %1125 = vmatpush2.msra.mxu0 0.0
    %1126 = vmatprep.mubr.f32.mxu0 0.0
    %1127 = vmatmul.mubr.f32.gmra.mxu0 %v1060
    %v1128 = vpop.f32.mrf.mxu0
    %v1129 = vadd.f32 0.0, %v1128
    %v1130 = vpop.f32.mrf.mxu0
    %v1131 = vadd.f32 0.0, %v1130
    %1132 = vdwg.mxu0
    %v1135 = vrot.slane %v1129, 2
    %v1136 = vrot.slane %v1131, 2
    %v1139 = vadd.f32 %v286, %v1135
    %v1140 = vadd.f32 %v288, %v1136
    %v1141 = vxor.u32 %v1139, 2147483648
    %v1142 = vxor.u32 %v1140, 2147483648
    %v1143 = vmul.f32 %v1141, 1.442695
    %v1144 = vpow.pop %v1143
    %v1145 = vmul.f32 %v1142, 1.442695
    %v1146 = vpow.pop %v1145
    %v1147 = vadd.f32 %v1144, 1.0
    %v1148 = vadd.f32 %v1146, 1.0
    %v1149 = vrcp.pop %v1147
    %v1150 = vmul.f32 1.0, %v1149
    %v1151 = vrcp.pop %v1148
    %v1152 = vmul.f32 1.0, %v1151
    %v1153 = vtanh.pop %v1140
    %v1155 = vrot.slane %v1053, 6
    %v1157 = vmul.f32 %v1150, %v1155
    %v1158 = vmul.f32 %v1150, %v1153
    %1160 = vrot.lane.b32.xlu0 %v1158, 64
    %v1161 = vpop.permute.xlu0 %1160
    %v1163 = vadd.f32 %v1157, %v1161
    %v1164 = vtanh.pop %v1163
    %v1165 = vmul.f32 %v1152, %v1164
    %vm1166 = vcmask 1041408
    %v1167 = vsel %vm1166, %v403, %v512
    %vm1168 = vcmask 1043456
    %v1169 = vsel %vm1168, %v1167, %v622
    %vm1170 = vcmask 1045504
    %v1171 = vsel %vm1170, %v1169, %v732
    %v1172 = vsel %vm1166, %v836, %v945
    %v1173 = vsel %vm1168, %v1172, %v1055
    %v1174 = vsel %vm1170, %v1173, %v1165
    %v1176 = vrot.slane %v1165, 6
    %v1178 = vrot.slane %v1055, 2
    %v1180 = vrot.slane %v945, 6
    %v1182 = vrot.slane %v836, 2
    %v1185 = vrot.slane %v622, 2
    %v1187 = vrot.slane %v512, 6
    %v1189 = vrot.slane %v403, 2
    %v1191 = vsel %vm1166, %v1176, %v1178
    %v1192 = vsel %vm1168, %v1191, %v1180
    %v1193 = vsel %vm1170, %v1192, %v1182
    %v1194 = vsel %vm1166, %v734, %v1185
    %v1195 = vsel %vm1168, %v1194, %v1187
    %v1196 = vsel %vm1170, %v1195, %v1189
    %1199 = vrot.lane.b32.xlu0 %v1171, 96
    %v1200 = vpop.permute.xlu0 %1199
    %1201 = vrot.lane.b32.xlu0 %v1174, 96
    %v1202 = vpop.permute.xlu0 %1201
    %1207 = vrot.lane.b32.xlu0 %v1193, 96
    %v1208 = vpop.permute.xlu0 %1207
    %1209 = vrot.lane.b32.xlu0 %v1196, 96
    %v1210 = vpop.permute.xlu0 %1209
    %vm1213 = vcmask 261120
    %v1214 = vsel %vm1213, %v170, %v1200
    %v1215 = vsel %vm1213, %v175, %v1202
    %v1216 = vsel %vm206, %v1214, %v1208
    %v1217 = vsel %vm206, %v1215, %v1210
    %vm1218 = vcmask 785408
    %v1219 = vsel %vm1218, %v1216, 0.0
    %v1220 = vsel %vm1218, %v1217, 0.0
    %1221 = vst [vmem:[#allocation2] sm:$0xff] %v1219
    %1222 = vst [vmem:[#allocation2 + $0x8] sm:$0xff] %v1220
    %v1223 = vld [vmem:[#allocation2] sm:$0xff]
    %v1224 = vld [vmem:[#allocation2 + $0x8] sm:$0xf]
    %v1225 = vld [vmem:[%s5] sm:$0xff]
    %v1226 = vld [vmem:[%s5 + $0x8] sm:$0xff]
    %v1227 = vld [vmem:[%s5 + $0x10] sm:$0xff]
    %v1228 = vld [vmem:[%s5 + $0x18] sm:$0xff]
    %v1229 = vld [vmem:[%s5 + $0x20] sm:$0xff]
    %v1230 = vld [vmem:[%s5 + $0x28] sm:$0xff]
    %v1231 = vld [vmem:[%s5 + $0x30] sm:$0xff]
    %v1232 = vld [vmem:[%s5 + $0x38] sm:$0xff]
    %v1233 = vld [vmem:[%s5 + $0x40] sm:$0xff]
    %v1234 = vld [vmem:[%s5 + $0x48] sm:$0xff]
    %v1235 = vld [vmem:[%s5 + $0x50] sm:$0xff]
    %v1236 = vld [vmem:[%s5 + $0x58] sm:$0xff]
    %v1237 = vld [vmem:[%s5 + $0x60] sm:$0xff]
    %v1238 = vld [vmem:[%s5 + $0x68] sm:$0xff]
    %v1239 = vld [vmem:[%s5 + $0x70] sm:$0xff]
    %v1240 = vld [vmem:[%s5 + $0x78] sm:$0xff]
    %v1241 = vld [vmem:[#allocation2 + $0x2] sm:$0xff]
    %v1242 = vld [vmem:[#allocation2 + $0xa] sm:$0xf]
    %v1243 = vld [vmem:[%s5 + $0x80] sm:$0xff]
    %v1244 = vld [vmem:[%s5 + $0x88] sm:$0xff]
    %v1245 = vld [vmem:[%s5 + $0x90] sm:$0xff]
    %v1246 = vld [vmem:[%s5 + $0x98] sm:$0xff]
    %v1247 = vld [vmem:[%s5 + $0xa0] sm:$0xff]
    %v1248 = vld [vmem:[%s5 + $0xa8] sm:$0xff]
    %v1249 = vld [vmem:[%s5 + $0xb0] sm:$0xff]
    %v1250 = vld [vmem:[%s5 + $0xb8] sm:$0xff]
    %v1251 = vld [vmem:[%s5 + $0xc0] sm:$0xff]
    %v1252 = vld [vmem:[%s5 + $0xc8] sm:$0xff]
    %v1253 = vld [vmem:[%s5 + $0xd0] sm:$0xff]
    %v1254 = vld [vmem:[%s5 + $0xd8] sm:$0xff]
    %v1255 = vld [vmem:[%s5 + $0xe0] sm:$0xff]
    %v1256 = vld [vmem:[%s5 + $0xe8] sm:$0xff]
    %v1257 = vld [vmem:[%s5 + $0xf0] sm:$0xff]
    %v1258 = vld [vmem:[%s5 + $0xf8] sm:$0xff]
    %1259 = vmatprep.subr.mxu0 0.0
    %1260 = vmatpush1.msra.mxu0 %v1258
    %1261 = vmatprep.subr.mxu0 0.0
    %1262 = vmatpush1.msra.mxu0 %v1257
    %1263 = vmatprep.subr.mxu0 0.0
    %1264 = vmatpush1.msra.mxu0 %v1256
    %1265 = vmatprep.subr.mxu0 0.0
    %1266 = vmatpush1.msra.mxu0 %v1255
    %1267 = vmatprep.subr.mxu0 0.0
    %1268 = vmatpush1.msra.mxu0 %v1254
    %1269 = vmatprep.subr.mxu0 0.0
    %1270 = vmatpush1.msra.mxu0 %v1253
    %1271 = vmatprep.subr.mxu0 0.0
    %1272 = vmatpush1.msra.mxu0 %v1252
    %1273 = vmatprep.subr.mxu0 0.0
    %1274 = vmatpush1.msra.mxu0 %v1251
    %1275 = vmatprep.subr.mxu0 0.0
    %1276 = vmatpush1.msra.mxu0 %v1250
    %1277 = vmatprep.subr.mxu0 0.0
    %1278 = vmatpush1.msra.mxu0 %v1249
    %1279 = vmatprep.subr.mxu0 0.0
    %1280 = vmatpush1.msra.mxu0 %v1248
    %1281 = vmatprep.subr.mxu0 0.0
    %1282 = vmatpush1.msra.mxu0 %v1247
    %1283 = vmatprep.subr.mxu0 0.0
    %1284 = vmatpush1.msra.mxu0 %v1246
    %1285 = vmatprep.subr.mxu0 0.0
    %1286 = vmatpush1.msra.mxu0 %v1245
    %1287 = vmatprep.subr.mxu0 0.0
    %1288 = vmatpush1.msra.mxu0 %v1244
    %1289 = vmatprep.subr.mxu0 0.0
    %1290 = vmatpush1.msra.mxu0 %v1243
    %1291 = vmatprep.subr.mxu0 0.0
    %1292 = vmatpush2.msra.mxu0 0.0
    %1293 = vmatprep.subr.mxu0 0.0
    %1294 = vmatpush2.msra.mxu0 0.0
    %1295 = vmatprep.subr.mxu0 0.0
    %1296 = vmatpush2.msra.mxu0 0.0
    %1297 = vmatprep.subr.mxu0 0.0
    %1298 = vmatpush2.msra.mxu0 0.0
    %1299 = vmatprep.subr.mxu0 0.0
    %1300 = vmatpush2.msra.mxu0 0.0
    %1301 = vmatprep.subr.mxu0 0.0
    %1302 = vmatpush2.msra.mxu0 0.0
    %1303 = vmatprep.subr.mxu0 0.0
    %1304 = vmatpush2.msra.mxu0 0.0
    %1305 = vmatprep.subr.mxu0 0.0
    %1306 = vmatpush2.msra.mxu0 0.0
    %1307 = vmatprep.subr.mxu0 0.0
    %1308 = vmatpush2.msra.mxu0 0.0
    %1309 = vmatprep.subr.mxu0 0.0
    %1310 = vmatpush2.msra.mxu0 0.0
    %1311 = vmatprep.subr.mxu0 0.0
    %1312 = vmatpush2.msra.mxu0 0.0
    %1313 = vmatprep.subr.mxu0 0.0
    %1314 = vmatpush2.msra.mxu0 0.0
    %1315 = vmatprep.subr.mxu0 0.0
    %1316 = vmatpush2.msra.mxu0 0.0
    %1317 = vmatprep.subr.mxu0 0.0
    %1318 = vmatpush2.msra.mxu0 0.0
    %1319 = vmatprep.subr.mxu0 0.0
    %1320 = vmatpush2.msra.mxu0 0.0
    %1321 = vmatprep.subr.mxu0 0.0
    %1322 = vmatpush2.msra.mxu0 0.0
    %1323 = vmatprep.mubr.f32.mxu0 0.0
    %1324 = vmatmul.mubr.f32.gmra.mxu0 %v1241
    %v1325 = vpop.f32.mrf.mxu0
    %v1326 = vadd.f32 0.0, %v1325
    %v1327 = vpop.f32.mrf.mxu0
    %1328 = vmatprep.mubr.f32.mxu0 0.0
    %1329 = vmatmul.mubr.f32.gmra.mxu0 %v1242
    %v1330 = vpop.f32.mrf.mxu0
    %v1331 = vadd.f32 0.0, %v1330
    %v1332 = vpop.f32.mrf.mxu0
    %1333 = vdwg.mxu0
    %1334 = vmatprep.subr.mxu0 0.0
    %1335 = vmatpush1.msra.mxu0 %v1240
    %1336 = vmatprep.subr.mxu0 0.0
    %1337 = vmatpush1.msra.mxu0 %v1239
    %1338 = vmatprep.subr.mxu0 0.0
    %1339 = vmatpush1.msra.mxu0 %v1238
    %1340 = vmatprep.subr.mxu0 0.0
    %1341 = vmatpush1.msra.mxu0 %v1237
    %1342 = vmatprep.subr.mxu0 0.0
    %1343 = vmatpush1.msra.mxu0 %v1236
    %1344 = vmatprep.subr.mxu0 0.0
    %1345 = vmatpush1.msra.mxu0 %v1235
    %1346 = vmatprep.subr.mxu0 0.0
    %1347 = vmatpush1.msra.mxu0 %v1234
    %1348 = vmatprep.subr.mxu0 0.0
    %1349 = vmatpush1.msra.mxu0 %v1233
    %1350 = vmatprep.subr.mxu0 0.0
    %1351 = vmatpush1.msra.mxu0 %v1232
    %1352 = vmatprep.subr.mxu0 0.0
    %1353 = vmatpush1.msra.mxu0 %v1231
    %1354 = vmatprep.subr.mxu0 0.0
    %1355 = vmatpush1.msra.mxu0 %v1230
    %1356 = vmatprep.subr.mxu0 0.0
    %1357 = vmatpush1.msra.mxu0 %v1229
    %1358 = vmatprep.subr.mxu0 0.0
    %1359 = vmatpush1.msra.mxu0 %v1228
    %1360 = vmatprep.subr.mxu0 0.0
    %1361 = vmatpush1.msra.mxu0 %v1227
    %1362 = vmatprep.subr.mxu0 0.0
    %1363 = vmatpush1.msra.mxu0 %v1226
    %1364 = vmatprep.subr.mxu0 0.0
    %1365 = vmatpush1.msra.mxu0 %v1225
    %1366 = vmatprep.subr.mxu0 0.0
    %1367 = vmatpush2.msra.mxu0 0.0
    %1368 = vmatprep.subr.mxu0 0.0
    %1369 = vmatpush2.msra.mxu0 0.0
    %1370 = vmatprep.subr.mxu0 0.0
    %1371 = vmatpush2.msra.mxu0 0.0
    %1372 = vmatprep.subr.mxu0 0.0
    %1373 = vmatpush2.msra.mxu0 0.0
    %1374 = vmatprep.subr.mxu0 0.0
    %1375 = vmatpush2.msra.mxu0 0.0
    %1376 = vmatprep.subr.mxu0 0.0
    %1377 = vmatpush2.msra.mxu0 0.0
    %1378 = vmatprep.subr.mxu0 0.0
    %1379 = vmatpush2.msra.mxu0 0.0
    %1380 = vmatprep.subr.mxu0 0.0
    %1381 = vmatpush2.msra.mxu0 0.0
    %1382 = vmatprep.subr.mxu0 0.0
    %1383 = vmatpush2.msra.mxu0 0.0
    %1384 = vmatprep.subr.mxu0 0.0
    %1385 = vmatpush2.msra.mxu0 0.0
    %1386 = vmatprep.subr.mxu0 0.0
    %1387 = vmatpush2.msra.mxu0 0.0
    %1388 = vmatprep.subr.mxu0 0.0
    %1389 = vmatpush2.msra.mxu0 0.0
    %1390 = vmatprep.subr.mxu0 0.0
    %1391 = vmatpush2.msra.mxu0 0.0
    %1392 = vmatprep.subr.mxu0 0.0
    %1393 = vmatpush2.msra.mxu0 0.0
    %1394 = vmatprep.subr.mxu0 0.0
    %1395 = vmatpush2.msra.mxu0 0.0
    %1396 = vmatprep.subr.mxu0 0.0
    %1397 = vmatpush2.msra.mxu0 0.0
    %1398 = vmatprep.mubr.f32.mxu0 0.0
    %1399 = vmatmul.mubr.f32.gmra.mxu0 %v1223
    %v1400 = vpop.f32.mrf.mxu0
    %v1401 = vadd.f32 %v1326, %v1400
    %v1402 = vpop.f32.mrf.mxu0
    %1403 = vmatprep.mubr.f32.mxu0 0.0
    %1404 = vmatmul.mubr.f32.gmra.mxu0 %v1224
    %v1405 = vpop.f32.mrf.mxu0
    %v1406 = vadd.f32 %v1331, %v1405
    %v1407 = vpop.f32.mrf.mxu0
    %1408 = vdwg.mxu0
    %v1409 = vld [vmem:[#allocation2 + $0x4] sm:$0xff]
    %v1410 = vld [vmem:[#allocation2 + $0xc] sm:$0xf]
    %v1411 = vld [vmem:[%s5 + $0x100] sm:$0xff]
    %v1412 = vld [vmem:[%s5 + $0x108] sm:$0xff]
    %v1413 = vld [vmem:[%s5 + $0x110] sm:$0xff]
    %v1414 = vld [vmem:[%s5 + $0x118] sm:$0xff]
    %v1415 = vld [vmem:[%s5 + $0x120] sm:$0xff]
    %v1416 = vld [vmem:[%s5 + $0x128] sm:$0xff]
    %v1417 = vld [vmem:[%s5 + $0x130] sm:$0xff]
    %v1418 = vld [vmem:[%s5 + $0x138] sm:$0xff]
    %v1419 = vld [vmem:[%s5 + $0x140] sm:$0xff]
    %v1420 = vld [vmem:[%s5 + $0x148] sm:$0xff]
    %v1421 = vld [vmem:[%s5 + $0x150] sm:$0xff]
    %v1422 = vld [vmem:[%s5 + $0x158] sm:$0xff]
    %v1423 = vld [vmem:[%s5 + $0x160] sm:$0xff]
    %v1424 = vld [vmem:[%s5 + $0x168] sm:$0xff]
    %v1425 = vld [vmem:[%s5 + $0x170] sm:$0xff]
    %v1426 = vld [vmem:[%s5 + $0x178] sm:$0xff]
    %1427 = vmatprep.subr.mxu0 0.0
    %1428 = vmatpush1.msra.mxu0 %v1426
    %1429 = vmatprep.subr.mxu0 0.0
    %1430 = vmatpush1.msra.mxu0 %v1425
    %1431 = vmatprep.subr.mxu0 0.0
    %1432 = vmatpush1.msra.mxu0 %v1424
    %1433 = vmatprep.subr.mxu0 0.0
    %1434 = vmatpush1.msra.mxu0 %v1423
    %1435 = vmatprep.subr.mxu0 0.0
    %1436 = vmatpush1.msra.mxu0 %v1422
    %1437 = vmatprep.subr.mxu0 0.0
    %1438 = vmatpush1.msra.mxu0 %v1421
    %1439 = vmatprep.subr.mxu0 0.0
    %1440 = vmatpush1.msra.mxu0 %v1420
    %1441 = vmatprep.subr.mxu0 0.0
    %1442 = vmatpush1.msra.mxu0 %v1419
    %1443 = vmatprep.subr.mxu0 0.0
    %1444 = vmatpush1.msra.mxu0 %v1418
    %1445 = vmatprep.subr.mxu0 0.0
    %1446 = vmatpush1.msra.mxu0 %v1417
    %1447 = vmatprep.subr.mxu0 0.0
    %1448 = vmatpush1.msra.mxu0 %v1416
    %1449 = vmatprep.subr.mxu0 0.0
    %1450 = vmatpush1.msra.mxu0 %v1415
    %1451 = vmatprep.subr.mxu0 0.0
    %1452 = vmatpush1.msra.mxu0 %v1414
    %1453 = vmatprep.subr.mxu0 0.0
    %1454 = vmatpush1.msra.mxu0 %v1413
    %1455 = vmatprep.subr.mxu0 0.0
    %1456 = vmatpush1.msra.mxu0 %v1412
    %1457 = vmatprep.subr.mxu0 0.0
    %1458 = vmatpush1.msra.mxu0 %v1411
    %1459 = vmatprep.subr.mxu0 0.0
    %1460 = vmatpush2.msra.mxu0 0.0
    %1461 = vmatprep.subr.mxu0 0.0
    %1462 = vmatpush2.msra.mxu0 0.0
    %1463 = vmatprep.subr.mxu0 0.0
    %1464 = vmatpush2.msra.mxu0 0.0
    %1465 = vmatprep.subr.mxu0 0.0
    %1466 = vmatpush2.msra.mxu0 0.0
    %1467 = vmatprep.subr.mxu0 0.0
    %1468 = vmatpush2.msra.mxu0 0.0
    %1469 = vmatprep.subr.mxu0 0.0
    %1470 = vmatpush2.msra.mxu0 0.0
    %1471 = vmatprep.subr.mxu0 0.0
    %1472 = vmatpush2.msra.mxu0 0.0
    %1473 = vmatprep.subr.mxu0 0.0
    %1474 = vmatpush2.msra.mxu0 0.0
    %1475 = vmatprep.subr.mxu0 0.0
    %1476 = vmatpush2.msra.mxu0 0.0
    %1477 = vmatprep.subr.mxu0 0.0
    %1478 = vmatpush2.msra.mxu0 0.0
    %1479 = vmatprep.subr.mxu0 0.0
    %1480 = vmatpush2.msra.mxu0 0.0
    %1481 = vmatprep.subr.mxu0 0.0
    %1482 = vmatpush2.msra.mxu0 0.0
    %1483 = vmatprep.subr.mxu0 0.0
    %1484 = vmatpush2.msra.mxu0 0.0
    %1485 = vmatprep.subr.mxu0 0.0
    %1486 = vmatpush2.msra.mxu0 0.0
    %1487 = vmatprep.subr.mxu0 0.0
    %1488 = vmatpush2.msra.mxu0 0.0
    %1489 = vmatprep.subr.mxu0 0.0
    %1490 = vmatpush2.msra.mxu0 0.0
    %1491 = vmatprep.mubr.f32.mxu0 0.0
    %1492 = vmatmul.mubr.f32.gmra.mxu0 %v1409
    %v1493 = vpop.f32.mrf.mxu0
    %v1494 = vadd.f32 0.0, %v1493
    %v1495 = vpop.f32.mrf.mxu0
    %1496 = vmatprep.mubr.f32.mxu0 0.0
    %1497 = vmatmul.mubr.f32.gmra.mxu0 %v1410
    %v1498 = vpop.f32.mrf.mxu0
    %v1499 = vadd.f32 0.0, %v1498
    %v1500 = vpop.f32.mrf.mxu0
    %1501 = vdwg.mxu0
    %v1502 = vadd.f32 %v1401, %v1494
    %v1503 = vadd.f32 %v1406, %v1499
    %v1504 = vld [vmem:[%s6] sm:$0x1]
    %v1506 = vlaneseq
    %v1507 = vshrl.u32 %v1506, 7
    %v1508 = vsub.s32 0, %v1507
    %v1509 = vrot.slane %v1504, %v1508
    %v1511 = vadd.f32 %v1502, %v1509
    %v1512 = vadd.f32 %v1503, %v1509
    %v1513 = vmax.f32 %v1511, 0.0
    %v1514 = vmax.f32 %v1512, 0.0
    %v1516 = vrot.slane %v1513, 2
    %v1518 = vmax.f32 %v1513, %v1516
    %v1519 = vrot.slane %v1513, 4
    %v1521 = vmax.f32 %v1518, %v1519
    %v1522 = vadd.f32 %v1521, 0.0
    %v1524 = vrot.slane %v1514, 4
    %v1526 = vmax.f32 %v1518, %v1524
    %v1528 = vrot.slane %v1526, 4
    %v1530 = vadd.f32 %v1522, %v1528
    %v1531 = vmul.f32 %v1530, 0.5
    %v1532 = vld [vmem:[%s7] sm:$0xff]
    %v1533 = vld [vmem:[%s7 + $0x8] sm:$0xff]
    %v1534 = vld [vmem:[%s7 + $0x10] sm:$0xff]
    %v1535 = vld [vmem:[%s7 + $0x18] sm:$0xff]
    %v1536 = vld [vmem:[%s7 + $0x20] sm:$0xff]
    %v1537 = vld [vmem:[%s7 + $0x28] sm:$0xff]
    %v1538 = vld [vmem:[%s7 + $0x30] sm:$0xff]
    %v1539 = vld [vmem:[%s7 + $0x38] sm:$0xff]
    %v1540 = vld [vmem:[%s7 + $0x40] sm:$0xff]
    %v1541 = vld [vmem:[%s7 + $0x48] sm:$0xff]
    %v1542 = vld [vmem:[%s7 + $0x50] sm:$0xff]
    %v1543 = vld [vmem:[%s7 + $0x58] sm:$0xff]
    %v1544 = vld [vmem:[%s7 + $0x60] sm:$0xff]
    %v1545 = vld [vmem:[%s7 + $0x68] sm:$0xff]
    %v1546 = vld [vmem:[%s7 + $0x70] sm:$0xff]
    %v1547 = vld [vmem:[%s7 + $0x78] sm:$0xff]
    %v1548 = vld [vmem:[%s8] sm:$0x1]
    %v1550 = vlaneseq
    %v1551 = vshrl.u32 %v1550, 7
    %v1552 = vsub.s32 0, %v1551
    %v1553 = vrot.slane %v1548, %v1552
    %1555 = vmatprep.subr.mxu0 0.0
    %1556 = vmatpush1.msra.mxu0 %v1547
    %1557 = vmatprep.subr.mxu0 0.0
    %1558 = vmatpush1.msra.mxu0 %v1546
    %1559 = vmatprep.subr.mxu0 0.0
    %1560 = vmatpush1.msra.mxu0 %v1545
    %1561 = vmatprep.subr.mxu0 0.0
    %1562 = vmatpush1.msra.mxu0 %v1544
    %1563 = vmatprep.subr.mxu0 0.0
    %1564 = vmatpush1.msra.mxu0 %v1543
    %1565 = vmatprep.subr.mxu0 0.0
    %1566 = vmatpush1.msra.mxu0 %v1542
    %1567 = vmatprep.subr.mxu0 0.0
    %1568 = vmatpush1.msra.mxu0 %v1541
    %1569 = vmatprep.subr.mxu0 0.0
    %1570 = vmatpush1.msra.mxu0 %v1540
    %1571 = vmatprep.subr.mxu0 0.0
    %1572 = vmatpush1.msra.mxu0 %v1539
    %1573 = vmatprep.subr.mxu0 0.0
    %1574 = vmatpush1.msra.mxu0 %v1538
    %1575 = vmatprep.subr.mxu0 0.0
    %1576 = vmatpush1.msra.mxu0 %v1537
    %1577 = vmatprep.subr.mxu0 0.0
    %1578 = vmatpush1.msra.mxu0 %v1536
    %1579 = vmatprep.subr.mxu0 0.0
    %1580 = vmatpush1.msra.mxu0 %v1535
    %1581 = vmatprep.subr.mxu0 0.0
    %1582 = vmatpush1.msra.mxu0 %v1534
    %1583 = vmatprep.subr.mxu0 0.0
    %1584 = vmatpush1.msra.mxu0 %v1533
    %1585 = vmatprep.subr.mxu0 0.0
    %1586 = vmatpush1.msra.mxu0 %v1532
    %1587 = vmatprep.subr.mxu0 0.0
    %1588 = vmatpush2.msra.mxu0 0.0
    %1589 = vmatprep.subr.mxu0 0.0
    %1590 = vmatpush2.msra.mxu0 0.0
    %1591 = vmatprep.subr.mxu0 0.0
    %1592 = vmatpush2.msra.mxu0 0.0
    %1593 = vmatprep.subr.mxu0 0.0
    %1594 = vmatpush2.msra.mxu0 0.0
    %1595 = vmatprep.subr.mxu0 0.0
    %1596 = vmatpush2.msra.mxu0 0.0
    %1597 = vmatprep.subr.mxu0 0.0
    %1598 = vmatpush2.msra.mxu0 0.0
    %1599 = vmatprep.subr.mxu0 0.0
    %1600 = vmatpush2.msra.mxu0 0.0
    %1601 = vmatprep.subr.mxu0 0.0
    %1602 = vmatpush2.msra.mxu0 0.0
    %1603 = vmatprep.subr.mxu0 0.0
    %1604 = vmatpush2.msra.mxu0 0.0
    %1605 = vmatprep.subr.mxu0 0.0
    %1606 = vmatpush2.msra.mxu0 0.0
    %1607 = vmatprep.subr.mxu0 0.0
    %1608 = vmatpush2.msra.mxu0 0.0
    %1609 = vmatprep.subr.mxu0 0.0
    %1610 = vmatpush2.msra.mxu0 0.0
    %1611 = vmatprep.subr.mxu0 0.0
    %1612 = vmatpush2.msra.mxu0 0.0
    %1613 = vmatprep.subr.mxu0 0.0
    %1614 = vmatpush2.msra.mxu0 0.0
    %1615 = vmatprep.subr.mxu0 0.0
    %1616 = vmatpush2.msra.mxu0 0.0
    %1617 = vmatprep.subr.mxu0 0.0
    %1618 = vmatpush2.msra.mxu0 0.0
    %1619 = vmatprep.mubr.f32.mxu0 0.0
    %1620 = vmatmul.mubr.f32.gmra.mxu0 %v1531
    %v1621 = vpop.f32.mrf.mxu0
    %v1622 = vadd.f32 %v1553, %v1621
    %v1623 = vpop.f32.mrf.mxu0
    %1624 = vdwg.mxu0
    %vm1625 = vcmask 74752
    %1626 = vst.msk [vmem:[#allocation8] sm:$0x3] %vm1625, %v1622
    // Predicated region
    $region46: #{_rcnn_forward_impl.1} parent=1 // pred_check
      _
    $region47: #{_rcnn_forward_impl.1} parent=1 // pred_check_branch
      %1628 = sbr.rel (0) target = $region49
    $region48: #{_rcnn_forward_impl.1} parent=1 // pred_region
      %s1630 = ssub.s32 32, 32
      %1631 = vsyncadd [#allocation5], %s1630
      %s1633 = sshll.u32 [#allocation8], 4
      %s1634 = int_to_ptr.vmem [resolvable:$true] %s1633
      %1636 = dma.vmem_to_hbm [thread:$0]  %s1634, 32, %s9, [#allocation5]
    $region49: #{_rcnn_forward_impl.1} parent=1 // pred_fallthru
      _
    // Predicated region
    $region50: #{_rcnn_forward_impl.1} parent=1 // pred_check
      _
    $region51: #{_rcnn_forward_impl.1} parent=1 // pred_check_branch
      %1638 = sbr.rel (0) target = $region53
    $region52: #{_rcnn_forward_impl.1} parent=1 // pred_region
      %1639 = dma.done [#allocation5], 32
    $region53: #{_rcnn_forward_impl.1} parent=1 // pred_fallthru
      _
    %1640 = vsyncpa [#allocation4], 1
    %1641 = vsyncpa [#allocation7], 1
    %1642 = vsyncpa [#allocation5], 1

</llo_original>
